<compile_context>
chip_gen: v7x
topology: tpu7x:2x2x1
jax: 0.10.0
libtpu: 0.0.40
codegen_flags: <defaults>
</compile_context>

<pallas_src>
import math

import jax
import jax.numpy as jnp
from jax import lax
from jax.experimental import pallas as pl
from jax.experimental.pallas import tpu as pltpu

# ----------------------------- sizes ---------------------------------------
B = 2                 # batch
C_LAT = 4             # latent channels (NCHW input, like PyTorch)
H = W = 16
HW = H * W            # 256 -> lane-dense
CLIP_DIM = 32         # CLIP image-embedding dim
D_CROSS = 64          # cross-attention dim (text hidden size)
NUM_IP_TOKENS = 4     # extra context tokens produced by image_proj_model
S_TEXT = 8            # text sequence length
C_MODEL = 64          # UNet inner channel count
D_HEAD = 64           # attention head dim (single head)
T_DIM = 32            # sinusoidal timestep embedding dim
IP_SCALE = 1.0        # folded into to_v_ip at pack time
EPS = 1e-5
C_OUT_PAD = 8         # output channels padded to a full sublane group

# w_stack row indices
_WQ_T, _WK, _WV, _WK_IP, _WV_IP, _WO_T = range(6)
# colvec column indices
_G2, _BE2, _BO, _BCO = range(4)


# ------------------- fused kernel: image_proj + UNet stand-in ---------------
def ip_unet_kernel(x_ref, emb_ref, text_ref, te_ref,
                   wproj_ref, pmisc_ref, wcit_ref, wstack_ref, colvec_ref,
                   wco_ref, out_ref):
    f32 = jnp.float32
    bf16 = jnp.bfloat16
    colvec = colvec_ref[...]                        # (C_MODEL, 4) f32
    pmisc = pmisc_ref[...]                          # (T+2, D_CROSS) f32

    # ---- image_proj_model: ONE MXU contraction + one fused LayerNorm -------
    # emb_ref[0] is the block-diagonally replicated CLIP embedding (T, T*CLIP),
    # wproj_ref is the matching (T*CLIP, D_CROSS) weight -> direct (T, D) tile.
    toks = jnp.dot(emb_ref[0], wproj_ref[...],
                   preferred_element_type=f32)      # (T, D_CROSS) f32
    toks = toks + pmisc[0:NUM_IP_TOKENS, :]
    s1 = jnp.sum(toks, axis=-1, keepdims=True)
    s2 = jnp.sum(toks * toks, axis=-1, keepdims=True)
    mu = s1 * (1.0 / D_CROSS)
    var = s2 * (1.0 / D_CROSS) - mu * mu
    toks = ((toks - mu) * lax.rsqrt(var + EPS)
            * pmisc[NUM_IP_TOKENS:NUM_IP_TOKENS + 1, :]
            + pmisc[NUM_IP_TOKENS + 1:NUM_IP_TOKENS + 2, :])
    ip_pad = jnp.concatenate(
        [toks, jnp.zeros((S_TEXT - NUM_IP_TOKENS, D_CROSS), f32)],
        axis=0).astype(bf16)                        # (8, D_CROSS)

    # ---- conv_in (1x1 == per-pixel linear), channel-major ------------------
    # conv_in bias is folded into te_ref in the wrapper.
    h = jnp.dot(wcit_ref[...], x_ref[0],
                preferred_element_type=f32)         # (C_MODEL, HW) f32
    h = h + te_ref[0]

    # conv_out of the residual branch, hoisted so `h` need not stay live
    # across the attention block:  out = wco@(h+attn) = (wco@h) + wco@attn.
    out_part = (jnp.dot(wco_ref[...], h.astype(bf16),
                        preferred_element_type=f32)
                + colvec[0:C_OUT_PAD, _BCO:_BCO + 1])          # (8, HW)

    # ---- LayerNorm over channels (one-pass stats, sublane reduce) ----------
    c1 = jnp.sum(h, axis=0, keepdims=True)
    c2 = jnp.sum(h * h, axis=0, keepdims=True)
    cmu = c1 * (1.0 / C_MODEL)
    cvar = c2 * (1.0 / C_MODEL) - cmu * cmu
    hn = ((h - cmu) * lax.rsqrt(cvar + EPS) * colvec[:, _G2:_G2 + 1]
          + colvec[:, _BE2:_BE2 + 1])

    # ---- IP-Adapter cross attention (merged score / output matmuls) --------
    # 1/sqrt(D_HEAD) is folded into to_q at pack time.
    q = jnp.dot(wstack_ref[_WQ_T], hn.astype(bf16),
                preferred_element_type=f32).astype(bf16)       # (D_HEAD, HW)

    text = text_ref[0]                                         # (S_TEXT, D_CROSS) bf16
    k_all = jnp.concatenate(
        [jnp.dot(text, wstack_ref[_WK], preferred_element_type=f32),
         jnp.dot(ip_pad, wstack_ref[_WK_IP], preferred_element_type=f32)],
        axis=0).astype(bf16)                                   # (16, D_HEAD)
    v_all = jnp.concatenate(
        [jnp.dot(text, wstack_ref[_WV], preferred_element_type=f32),
         jnp.dot(ip_pad, wstack_ref[_WV_IP], preferred_element_type=f32)],
        axis=0)                                                # (16, D_HEAD) f32

    s = jnp.dot(k_all, q, preferred_element_type=f32)          # (16, HW) f32
    # Padded IP rows (12:16) must not pollute the IP softmax denominator.
    row = lax.broadcasted_iota(jnp.int32, (2 * S_TEXT, 1), 0)
    s = s + jnp.where(row >= S_TEXT + NUM_IP_TOKENS,
                      jnp.float32(-1e30), jnp.float32(0.0))

    def seg_softmax(seg):            # softmax over the 8 sublanes of a segment
        m = jnp.max(seg, axis=0, keepdims=True)
        p = jnp.exp(seg - m)
        return p * pl.reciprocal(jnp.sum(p, axis=0, keepdims=True), approx=True)

    p_all = jnp.concatenate([seg_softmax(s[0:S_TEXT]),
                             seg_softmax(s[S_TEXT:2 * S_TEXT])],
                            axis=0)                            # (16, HW) f32

    # V^T @ P in one dot_general (f32 operands: (0,0)-contraction kept in the
    # layout that is known to lower cleanly; the op is tiny either way).
    a = lax.dot_general(v_all, p_all, (((0,), (0,)), ((), ())),
                        preferred_element_type=f32)            # (D_HEAD, HW)
    attn_out = (jnp.dot(wstack_ref[_WO_T], a.astype(bf16),
                        preferred_element_type=f32)
                + colvec[:, _BO:_BO + 1])                      # (C_MODEL, HW)

    # ---- conv_out (1x1) of the attention branch + residual part ------------
    out_ref[0] = out_part + jnp.dot(wco_ref[...], attn_out.astype(bf16),
                                    preferred_element_type=f32)  # (8, HW)


# ------------------------------ glue ----------------------------------------
def timestep_embedding(timesteps, dim):
    half = dim // 2
    freqs = jnp.exp(-math.log(10000.0) *
                    jnp.arange(half, dtype=jnp.float32) / half)
    args = timesteps.astype(jnp.float32)[:, None] * freqs[None, :]
    return jnp.concatenate([jnp.cos(args), jnp.sin(args)], axis=-1)  # (B, dim)


def init_params(key):
    ks = jax.random.split(key, 12)
    n = lambda k, s: 0.05 * jax.random.normal(k, s, jnp.float32)
    return dict(
        # image_proj_model
        w_proj=n(ks[0], (CLIP_DIM, NUM_IP_TOKENS * D_CROSS)),
        b_proj=jnp.zeros((NUM_IP_TOKENS * D_CROSS,), jnp.float32),
        ln_g=jnp.ones((D_CROSS,), jnp.float32),
        ln_b=jnp.zeros((D_CROSS,), jnp.float32),
        # unet stand-in
        wci=n(ks[1], (C_LAT, C_MODEL)), bci=jnp.zeros((C_MODEL,), jnp.float32),
        wt1=n(ks[2], (T_DIM, C_MODEL)), bt1=jnp.zeros((C_MODEL,), jnp.float32),
        wt2=n(ks[3], (C_MODEL, C_MODEL)), bt2=jnp.zeros((C_MODEL,), jnp.float32),
        g2=jnp.ones((C_MODEL,), jnp.float32), be2=jnp.zeros((C_MODEL,), jnp.float32),
        wq=n(ks[4], (C_MODEL, D_HEAD)),
        wk=n(ks[5], (D_CROSS, D_HEAD)), wv=n(ks[6], (D_CROSS, D_HEAD)),
        wkip=n(ks[7], (D_CROSS, D_HEAD)),   # adapter_modules: to_k_ip
        wvip=n(ks[8], (D_CROSS, D_HEAD)),   # adapter_modules: to_v_ip
        wo=n(ks[9], (D_HEAD, C_MODEL)), bo=jnp.zeros((C_MODEL,), jnp.float32),
        wco=n(ks[10], (C_MODEL, C_LAT)), bco=jnp.zeros((C_LAT,), jnp.float32),
    )


def pack_params(p):
    """Repack weights into a few channel-major, bf16, DMA-friendly buffers."""
    bf16 = jnp.bfloat16
    # (CLIP, T*D) -> (T*CLIP, D): matches the block-diagonal embedding layout so
    # the whole image_proj Linear is one (T, T*CLIP) @ (T*CLIP, D) matmul.
    w_proj = (p["w_proj"].reshape(CLIP_DIM, NUM_IP_TOKENS, D_CROSS)
              .transpose(1, 0, 2).reshape(NUM_IP_TOKENS * CLIP_DIM, D_CROSS))
    proj_misc = jnp.concatenate(
        [p["b_proj"].reshape(NUM_IP_TOKENS, D_CROSS),
         p["ln_g"][None, :], p["ln_b"][None, :]], axis=0)      # (T+2, D) f32
    w_stack = jnp.stack([p["wq"].T * (1.0 / math.sqrt(D_HEAD)),  # attn scale folded
                         p["wk"], p["wv"], p["wkip"],
                         IP_SCALE * p["wvip"],                    # ip scale folded
                         p["wo"].T], axis=0)                      # (6, 64, 64)
    wco8_t = jnp.zeros((C_OUT_PAD, C_MODEL), jnp.float32).at[:C_LAT].set(p["wco"].T)
    bco_pad = jnp.zeros((C_MODEL,), jnp.float32).at[:C_LAT].set(p["bco"])
    colvec = jnp.stack([p["g2"], p["be2"], p["bo"], bco_pad], axis=1)  # (64, 4)
    return dict(
        w_proj=w_proj.astype(bf16), proj_misc=proj_misc,
        wci_t=p["wci"].T.astype(bf16),           # (C_MODEL, C_LAT)
        w_stack=w_stack.astype(bf16), colvec=colvec,
        wco_t=wco8_t.astype(bf16),               # (C_OUT_PAD, C_MODEL)
        wt1=p["wt1"], bt1=p["bt1"], wt2=p["wt2"], bt2=p["bt2"], bci=p["bci"],
    )


def fused_ip_unet(x, emb_blk, text, te_col, pk):
    return pl.pallas_call(
        ip_unet_kernel,
        out_shape=jax.ShapeDtypeStruct((B, C_OUT_PAD, HW), jnp.float32),
        grid=(B,),
        in_specs=[
            pl.BlockSpec((1, C_LAT, HW), lambda b: (b, 0, 0)),
            pl.BlockSpec((1, NUM_IP_TOKENS, NUM_IP_TOKENS * CLIP_DIM),
                         lambda b: (b, 0, 0)),
            pl.BlockSpec((1, S_TEXT, D_CROSS), lambda b: (b, 0, 0)),
            pl.BlockSpec((1, C_MODEL, 1), lambda b: (b, 0, 0)),
            pl.BlockSpec((NUM_IP_TOKENS * CLIP_DIM, D_CROSS), lambda b: (0, 0)),
            pl.BlockSpec((NUM_IP_TOKENS + 2, D_CROSS), lambda b: (0, 0)),
            pl.BlockSpec((C_MODEL, C_LAT), lambda b: (0, 0)),
            pl.BlockSpec((6, C_MODEL, C_MODEL), lambda b: (0, 0, 0)),
            pl.BlockSpec((C_MODEL, 4), lambda b: (0, 0)),
            pl.BlockSpec((C_OUT_PAD, C_MODEL), lambda b: (0, 0)),
        ],
        out_specs=pl.BlockSpec((1, C_OUT_PAD, HW), lambda b: (b, 0, 0)),
        # v7x: one batch per TensorCore.  On single-TC v5e/v6e this only costs
        # one extra ~0.35us grid step vs. a batch-merged single-step variant.
        compiler_params=pltpu.CompilerParams(
            dimension_semantics=("parallel",)),
    )(x, emb_blk, text, te_col,
      pk["w_proj"], pk["proj_misc"], pk["wci_t"], pk["w_stack"],
      pk["colvec"], pk["wco_t"])


@jax.jit
def ip_adapter_forward(noisy_latents, timesteps, encoder_hidden_states,
                       image_embeds, packed):
    # Channel-major: NCHW -> (B, C, H*W); no transpose needed.  bf16 for MXU.
    x = noisy_latents.reshape(B, C_LAT, HW).astype(jnp.bfloat16)
    text = encoder_hidden_states.astype(jnp.bfloat16)

    # Block-diagonal replication of the CLIP embedding: emb_blk[b, t, t*C:c..]
    # = image_embeds[b, c].  Lets image_proj run as ONE in-kernel MXU op that
    # lands directly on a (T, D_CROSS) tile (layout plumbing, not compute).
    eye = jnp.eye(NUM_IP_TOKENS, dtype=jnp.float32)
    emb_blk = (eye[None, :, :, None] * image_embeds[:, None, None, :]).reshape(
        B, NUM_IP_TOKENS, NUM_IP_TOKENS * CLIP_DIM).astype(jnp.bfloat16)

    # Timestep-embedding MLP hoisted out of the kernel (two M=1 matmuls);
    # conv_in bias folded into the same per-channel column.
    t_sin = timestep_embedding(timesteps, T_DIM)               # (B, T_DIM)
    te = t_sin @ packed["wt1"] + packed["bt1"]
    te = te * jax.nn.sigmoid(te)
    te = te @ packed["wt2"] + packed["bt2"] + packed["bci"]    # (B, C_MODEL)
    te_col = te[:, :, None]                                    # (B, C_MODEL, 1)

    noise = fused_ip_unet(x, emb_blk, text, te_col, packed)    # (B, 8, HW)
    return noise[:, :C_LAT, :].reshape(B, C_LAT, H, W)         # NCHW, like PyTorch


if __name__ == "__main__":
    key = jax.random.PRNGKey(0)
    ks = jax.random.split(key, 5)
    noisy_latents = jax.random.normal(ks[0], (B, C_LAT, H, W), jnp.float32)
    timesteps = jax.random.randint(ks[1], (B,), 0, 1000)
    encoder_hidden_states = jax.random.normal(ks[2], (B, S_TEXT, D_CROSS), jnp.float32)
    image_embeds = jax.random.normal(ks[3], (B, CLIP_DIM), jnp.float32)
    params = pack_params(init_params(ks[4]))

    out = ip_adapter_forward(noisy_latents, timesteps, encoder_hidden_states,
                             image_embeds, params)
    jax.block_until_ready(out)
    assert out.shape == noisy_latents.shape and out.dtype == jnp.float32
    assert bool(jnp.all(jnp.isfinite(out)))
    print("KERNEL_OK")
</pallas_src>

<mosaic_0001>
module attributes {stable_mosaic.version = 11 : i64} {
  func.func @ip_unet_kernel(%arg0: i32, %arg1: memref<1x4x256xbf16, #tpu.memory_space<vmem>>, %arg2: memref<1x4x128xbf16, #tpu.memory_space<vmem>>, %arg3: memref<1x8x64xbf16, #tpu.memory_space<vmem>>, %arg4: memref<1x64x1xf32, #tpu.memory_space<vmem>>, %arg5: memref<128x64xbf16, #tpu.memory_space<vmem>>, %arg6: memref<6x64xf32, #tpu.memory_space<vmem>>, %arg7: memref<64x4xbf16, #tpu.memory_space<vmem>>, %arg8: memref<6x64x64xbf16, #tpu.memory_space<vmem>>, %arg9: memref<64x4xf32, #tpu.memory_space<vmem>>, %arg10: memref<8x64xbf16, #tpu.memory_space<vmem>>, %arg11: memref<1x8x256xf32, #tpu.memory_space<vmem>>) attributes {dimension_semantics = [#tpu.dimension_semantics<parallel>], iteration_bounds = array<i64: 2>, scalar_prefetch = 0 : i64, scratch_operands = 0 : i64, tpu.core_type = #tpu.core_type<tc>, window_params = [{transform_indices = @transform_0, window_bounds = array<i64: 1, 4, 256>}, {transform_indices = @transform_1, window_bounds = array<i64: 1, 4, 128>}, {transform_indices = @transform_2, window_bounds = array<i64: 1, 8, 64>}, {transform_indices = @transform_3, window_bounds = array<i64: 1, 64, 1>}, {pipeline_mode = #tpu.pipeline_mode<synchronous>, transform_indices = @transform_4, window_bounds = array<i64: 128, 64>}, {pipeline_mode = #tpu.pipeline_mode<synchronous>, transform_indices = @transform_5, window_bounds = array<i64: 6, 64>}, {pipeline_mode = #tpu.pipeline_mode<synchronous>, transform_indices = @transform_6, window_bounds = array<i64: 64, 4>}, {pipeline_mode = #tpu.pipeline_mode<synchronous>, transform_indices = @transform_7, window_bounds = array<i64: 6, 64, 64>}, {pipeline_mode = #tpu.pipeline_mode<synchronous>, transform_indices = @transform_8, window_bounds = array<i64: 64, 4>}, {pipeline_mode = #tpu.pipeline_mode<synchronous>, transform_indices = @transform_9, window_bounds = array<i64: 8, 64>}, {transform_indices = @transform_10, window_bounds = array<i64: 1, 8, 256>}]} {
    %c0 = arith.constant 0 : index
    %c0_0 = arith.constant 0 : index
    %0 = vector.load %arg9[%c0, %c0_0] : memref<64x4xf32, #tpu.memory_space<vmem>>, vector<64x4xf32>
    %c0_1 = arith.constant 0 : index
    %c0_2 = arith.constant 0 : index
    %1 = vector.load %arg6[%c0_1, %c0_2] : memref<6x64xf32, #tpu.memory_space<vmem>>, vector<6x64xf32>
    %c0_3 = arith.constant 0 : index
    %c0_4 = arith.constant 0 : index
    %c0_5 = arith.constant 0 : index
    %2 = vector.load %arg2[%c0_3, %c0_4, %c0_5] : memref<1x4x128xbf16, #tpu.memory_space<vmem>>, vector<1x4x128xbf16>
    %3 = vector.shape_cast %2 : vector<1x4x128xbf16> to vector<4x128xbf16>
    %c0_6 = arith.constant 0 : index
    %c0_7 = arith.constant 0 : index
    %4 = vector.load %arg5[%c0_6, %c0_7] : memref<128x64xbf16, #tpu.memory_space<vmem>>, vector<128x64xbf16>
    %cst = arith.constant dense<0.000000e+00> : vector<4x64xf32>
    %5 = tpu.matmul %3, %4, %cst {dimension_numbers = #tpu.dot_dimension_numbers<[1], [0], [0], [1], [0, 0, 1, 1], [], []>} : vector<4x128xbf16>, vector<128x64xbf16>, vector<4x64xf32> -> vector<4x64xf32>
    %6 = vector.extract_strided_slice %1 {offsets = [0, 0], sizes = [4, 64], strides = [1, 1]} : vector<6x64xf32> to vector<4x64xf32>
    %7 = arith.addf %5, %6 : vector<4x64xf32>
    %cst_8 = arith.constant dense<0.000000e+00> : vector<4xf32>
    %8 = vector.multi_reduction <add>, %7, %cst_8 [1] : vector<4x64xf32> to vector<4xf32>
    %9 = vector.shape_cast %8 : vector<4xf32> to vector<4x1xf32>
    %10 = arith.mulf %7, %7 : vector<4x64xf32>
    %cst_9 = arith.constant dense<0.000000e+00> : vector<4xf32>
    %11 = vector.multi_reduction <add>, %10, %cst_9 [1] : vector<4x64xf32> to vector<4xf32>
    %12 = vector.shape_cast %11 : vector<4xf32> to vector<4x1xf32>
    %cst_10 = arith.constant 1.562500e-02 : f32
    %13 = vector.broadcast %cst_10 : f32 to vector<4x1xf32>
    %14 = arith.mulf %9, %13 : vector<4x1xf32>
    %cst_11 = arith.constant 1.562500e-02 : f32
    %15 = vector.broadcast %cst_11 : f32 to vector<4x1xf32>
    %16 = arith.mulf %12, %15 : vector<4x1xf32>
    %17 = arith.mulf %14, %14 : vector<4x1xf32>
    %18 = arith.subf %16, %17 : vector<4x1xf32>
    %19 = vector.broadcast %14 : vector<4x1xf32> to vector<4x64xf32>
    %20 = arith.subf %7, %19 : vector<4x64xf32>
    %cst_12 = arith.constant 9.99999974E-6 : f32
    %21 = vector.broadcast %cst_12 : f32 to vector<4x1xf32>
    %22 = arith.addf %18, %21 : vector<4x1xf32>
    %23 = math.rsqrt %22 : vector<4x1xf32>
    %24 = vector.broadcast %23 : vector<4x1xf32> to vector<4x64xf32>
    %25 = arith.mulf %20, %24 : vector<4x64xf32>
    %26 = vector.extract_strided_slice %1 {offsets = [4, 0], sizes = [1, 64], strides = [1, 1]} : vector<6x64xf32> to vector<1x64xf32>
    %27 = vector.broadcast %26 : vector<1x64xf32> to vector<4x64xf32>
    %28 = arith.mulf %25, %27 : vector<4x64xf32>
    %29 = vector.extract_strided_slice %1 {offsets = [5, 0], sizes = [1, 64], strides = [1, 1]} : vector<6x64xf32> to vector<1x64xf32>
    %30 = vector.broadcast %29 : vector<1x64xf32> to vector<4x64xf32>
    %31 = arith.addf %28, %30 : vector<4x64xf32>
    %cst_13 = arith.constant 0.000000e+00 : f32
    %32 = vector.broadcast %cst_13 : f32 to vector<4x64xf32>
    %33 = tpu.concatenate %31, %32 in 0 : vector<4x64xf32>, vector<4x64xf32> -> vector<8x64xf32>
    %34 = arith.truncf %33 : vector<8x64xf32> to vector<8x64xbf16>
    %c0_14 = arith.constant 0 : index
    %c0_15 = arith.constant 0 : index
    %35 = vector.load %arg7[%c0_14, %c0_15] : memref<64x4xbf16, #tpu.memory_space<vmem>>, vector<64x4xbf16>
    %c0_16 = arith.constant 0 : index
    %c0_17 = arith.constant 0 : index
    %c0_18 = arith.constant 0 : index
    %36 = vector.load %arg1[%c0_16, %c0_17, %c0_18] : memref<1x4x256xbf16, #tpu.memory_space<vmem>>, vector<1x4x256xbf16>
    %37 = vector.shape_cast %36 : vector<1x4x256xbf16> to vector<4x256xbf16>
    %cst_19 = arith.constant dense<0.000000e+00> : vector<64x256xf32>
    %38 = tpu.matmul %35, %37, %cst_19 {dimension_numbers = #tpu.dot_dimension_numbers<[1], [0], [0], [1], [0, 0, 1, 1], [], []>} : vector<64x4xbf16>, vector<4x256xbf16>, vector<64x256xf32> -> vector<64x256xf32>
    %c0_20 = arith.constant 0 : index
    %c0_21 = arith.constant 0 : index
    %c0_22 = arith.constant 0 : index
    %39 = vector.load %arg4[%c0_20, %c0_21, %c0_22] : memref<1x64x1xf32, #tpu.memory_space<vmem>>, vector<1x64x1xf32>
    %40 = vector.shape_cast %39 : vector<1x64x1xf32> to vector<64x1xf32>
    %41 = vector.broadcast %40 : vector<64x1xf32> to vector<64x256xf32>
    %42 = arith.addf %38, %41 : vector<64x256xf32>
    %c0_23 = arith.constant 0 : index
    %c0_24 = arith.constant 0 : index
    %43 = vector.load %arg10[%c0_23, %c0_24] : memref<8x64xbf16, #tpu.memory_space<vmem>>, vector<8x64xbf16>
    %44 = arith.truncf %42 : vector<64x256xf32> to vector<64x256xbf16>
    %cst_25 = arith.constant dense<0.000000e+00> : vector<8x256xf32>
    %45 = tpu.matmul %43, %44, %cst_25 {dimension_numbers = #tpu.dot_dimension_numbers<[1], [0], [0], [1], [0, 0, 1, 1], [], []>} : vector<8x64xbf16>, vector<64x256xbf16>, vector<8x256xf32> -> vector<8x256xf32>
    %46 = vector.extract_strided_slice %0 {offsets = [0, 3], sizes = [8, 1], strides = [1, 1]} : vector<64x4xf32> to vector<8x1xf32>
    %47 = vector.broadcast %46 : vector<8x1xf32> to vector<8x256xf32>
    %48 = arith.addf %45, %47 : vector<8x256xf32>
    %cst_26 = arith.constant dense<0.000000e+00> : vector<256xf32>
    %49 = vector.multi_reduction <add>, %42, %cst_26 [0] : vector<64x256xf32> to vector<256xf32>
    %50 = vector.shape_cast %49 : vector<256xf32> to vector<1x256xf32>
    %51 = arith.mulf %42, %42 : vector<64x256xf32>
    %cst_27 = arith.constant dense<0.000000e+00> : vector<256xf32>
    %52 = vector.multi_reduction <add>, %51, %cst_27 [0] : vector<64x256xf32> to vector<256xf32>
    %53 = vector.shape_cast %52 : vector<256xf32> to vector<1x256xf32>
    %cst_28 = arith.constant 1.562500e-02 : f32
    %54 = vector.broadcast %cst_28 : f32 to vector<1x256xf32>
    %55 = arith.mulf %50, %54 : vector<1x256xf32>
    %cst_29 = arith.constant 1.562500e-02 : f32
    %56 = vector.broadcast %cst_29 : f32 to vector<1x256xf32>
    %57 = arith.mulf %53, %56 : vector<1x256xf32>
    %58 = arith.mulf %55, %55 : vector<1x256xf32>
    %59 = arith.subf %57, %58 : vector<1x256xf32>
    %60 = vector.broadcast %55 : vector<1x256xf32> to vector<64x256xf32>
    %61 = arith.subf %42, %60 : vector<64x256xf32>
    %cst_30 = arith.constant 9.99999974E-6 : f32
    %62 = vector.broadcast %cst_30 : f32 to vector<1x256xf32>
    %63 = arith.addf %59, %62 : vector<1x256xf32>
    %64 = math.rsqrt %63 : vector<1x256xf32>
    %65 = vector.broadcast %64 : vector<1x256xf32> to vector<64x256xf32>
    %66 = arith.mulf %61, %65 : vector<64x256xf32>
    %67 = vector.extract_strided_slice %0 {offsets = [0, 0], sizes = [64, 1], strides = [1, 1]} : vector<64x4xf32> to vector<64x1xf32>
    %68 = vector.broadcast %67 : vector<64x1xf32> to vector<64x256xf32>
    %69 = arith.mulf %66, %68 : vector<64x256xf32>
    %70 = vector.extract_strided_slice %0 {offsets = [0, 1], sizes = [64, 1], strides = [1, 1]} : vector<64x4xf32> to vector<64x1xf32>
    %71 = vector.broadcast %70 : vector<64x1xf32> to vector<64x256xf32>
    %72 = arith.addf %69, %71 : vector<64x256xf32>
    %c0_31 = arith.constant 0 : index
    %c0_32 = arith.constant 0 : index
    %c0_33 = arith.constant 0 : index
    %73 = vector.load %arg8[%c0_31, %c0_32, %c0_33] : memref<6x64x64xbf16, #tpu.memory_space<vmem>>, vector<1x64x64xbf16>
    %74 = vector.shape_cast %73 : vector<1x64x64xbf16> to vector<64x64xbf16>
    %75 = arith.truncf %72 : vector<64x256xf32> to vector<64x256xbf16>
    %cst_34 = arith.constant dense<0.000000e+00> : vector<64x256xf32>
    %76 = tpu.matmul %74, %75, %cst_34 {dimension_numbers = #tpu.dot_dimension_numbers<[1], [0], [0], [1], [0, 0, 1, 1], [], []>} : vector<64x64xbf16>, vector<64x256xbf16>, vector<64x256xf32> -> vector<64x256xf32>
    %77 = arith.truncf %76 : vector<64x256xf32> to vector<64x256xbf16>
    %c0_35 = arith.constant 0 : index
    %c0_36 = arith.constant 0 : index
    %c0_37 = arith.constant 0 : index
    %78 = vector.load %arg3[%c0_35, %c0_36, %c0_37] : memref<1x8x64xbf16, #tpu.memory_space<vmem>>, vector<1x8x64xbf16>
    %79 = vector.shape_cast %78 : vector<1x8x64xbf16> to vector<8x64xbf16>
    %c1 = arith.constant 1 : index
    %c0_38 = arith.constant 0 : index
    %c0_39 = arith.constant 0 : index
    %80 = vector.load %arg8[%c1, %c0_38, %c0_39] : memref<6x64x64xbf16, #tpu.memory_space<vmem>>, vector<1x64x64xbf16>
    %81 = vector.shape_cast %80 : vector<1x64x64xbf16> to vector<64x64xbf16>
    %cst_40 = arith.constant dense<0.000000e+00> : vector<8x64xf32>
    %82 = tpu.matmul %79, %81, %cst_40 {dimension_numbers = #tpu.dot_dimension_numbers<[1], [0], [0], [1], [0, 0, 1, 1], [], []>} : vector<8x64xbf16>, vector<64x64xbf16>, vector<8x64xf32> -> vector<8x64xf32>
    %c3 = arith.constant 3 : index
    %c0_41 = arith.constant 0 : index
    %c0_42 = arith.constant 0 : index
    %83 = vector.load %arg8[%c3, %c0_41, %c0_42] : memref<6x64x64xbf16, #tpu.memory_space<vmem>>, vector<1x64x64xbf16>
    %84 = vector.shape_cast %83 : vector<1x64x64xbf16> to vector<64x64xbf16>
    %cst_43 = arith.constant dense<0.000000e+00> : vector<8x64xf32>
    %85 = tpu.matmul %34, %84, %cst_43 {dimension_numbers = #tpu.dot_dimension_numbers<[1], [0], [0], [1], [0, 0, 1, 1], [], []>} : vector<8x64xbf16>, vector<64x64xbf16>, vector<8x64xf32> -> vector<8x64xf32>
    %86 = tpu.concatenate %82, %85 in 0 : vector<8x64xf32>, vector<8x64xf32> -> vector<16x64xf32>
    %87 = arith.truncf %86 : vector<16x64xf32> to vector<16x64xbf16>
    %c2 = arith.constant 2 : index
    %c0_44 = arith.constant 0 : index
    %c0_45 = arith.constant 0 : index
    %88 = vector.load %arg8[%c2, %c0_44, %c0_45] : memref<6x64x64xbf16, #tpu.memory_space<vmem>>, vector<1x64x64xbf16>
    %89 = vector.shape_cast %88 : vector<1x64x64xbf16> to vector<64x64xbf16>
    %cst_46 = arith.constant dense<0.000000e+00> : vector<8x64xf32>
    %90 = tpu.matmul %79, %89, %cst_46 {dimension_numbers = #tpu.dot_dimension_numbers<[1], [0], [0], [1], [0, 0, 1, 1], [], []>} : vector<8x64xbf16>, vector<64x64xbf16>, vector<8x64xf32> -> vector<8x64xf32>
    %c4 = arith.constant 4 : index
    %c0_47 = arith.constant 0 : index
    %c0_48 = arith.constant 0 : index
    %91 = vector.load %arg8[%c4, %c0_47, %c0_48] : memref<6x64x64xbf16, #tpu.memory_space<vmem>>, vector<1x64x64xbf16>
    %92 = vector.shape_cast %91 : vector<1x64x64xbf16> to vector<64x64xbf16>
    %cst_49 = arith.constant dense<0.000000e+00> : vector<8x64xf32>
    %93 = tpu.matmul %34, %92, %cst_49 {dimension_numbers = #tpu.dot_dimension_numbers<[1], [0], [0], [1], [0, 0, 1, 1], [], []>} : vector<8x64xbf16>, vector<64x64xbf16>, vector<8x64xf32> -> vector<8x64xf32>
    %94 = tpu.concatenate %90, %93 in 0 : vector<8x64xf32>, vector<8x64xf32> -> vector<16x64xf32>
    %cst_50 = arith.constant dense<0.000000e+00> : vector<16x256xf32>
    %95 = tpu.matmul %87, %77, %cst_50 {dimension_numbers = #tpu.dot_dimension_numbers<[1], [0], [0], [1], [0, 0, 1, 1], [], []>} : vector<16x64xbf16>, vector<64x256xbf16>, vector<16x256xf32> -> vector<16x256xf32>
    %96 = tpu.iota {dimensions = array<i32: 0>} : vector<16x1xi32>
    %c12_i32 = arith.constant 12 : i32
    %97 = vector.broadcast %c12_i32 : i32 to vector<16x1xi32>
    %98 = arith.cmpi sge, %96, %97 : vector<16x1xi32>
    %cst_51 = arith.constant -1.000000e+30 : f32
    %cst_52 = arith.constant 0.000000e+00 : f32
    %99 = vector.broadcast %cst_51 : f32 to vector<16x1xf32>
    %100 = vector.broadcast %cst_52 : f32 to vector<16x1xf32>
    %101 = arith.select %98, %99, %100 : vector<16x1xi1>, vector<16x1xf32>
    %102 = vector.broadcast %101 : vector<16x1xf32> to vector<16x256xf32>
    %103 = arith.addf %95, %102 : vector<16x256xf32>
    %104 = vector.extract_strided_slice %103 {offsets = [0, 0], sizes = [8, 256], strides = [1, 1]} : vector<16x256xf32> to vector<8x256xf32>
    %cst_53 = arith.constant dense<0xFF800000> : vector<256xf32>
    %105 = vector.multi_reduction <maximumf>, %104, %cst_53 [0] : vector<8x256xf32> to vector<256xf32>
    %106 = vector.shape_cast %105 : vector<256xf32> to vector<1x256xf32>
    %107 = vector.broadcast %106 : vector<1x256xf32> to vector<8x256xf32>
    %108 = arith.subf %104, %107 : vector<8x256xf32>
    %109 = math.exp %108 : vector<8x256xf32>
    %cst_54 = arith.constant dense<0.000000e+00> : vector<256xf32>
    %110 = vector.multi_reduction <add>, %109, %cst_54 [0] : vector<8x256xf32> to vector<256xf32>
    %111 = vector.shape_cast %110 : vector<256xf32> to vector<1x256xf32>
    %112 = tpu.reciprocal %111 {approx = true} : vector<1x256xf32> -> vector<1x256xf32>
    %113 = vector.broadcast %112 : vector<1x256xf32> to vector<8x256xf32>
    %114 = arith.mulf %109, %113 : vector<8x256xf32>
    %115 = vector.extract_strided_slice %103 {offsets = [8, 0], sizes = [8, 256], strides = [1, 1]} : vector<16x256xf32> to vector<8x256xf32>
    %cst_55 = arith.constant dense<0xFF800000> : vector<256xf32>
    %116 = vector.multi_reduction <maximumf>, %115, %cst_55 [0] : vector<8x256xf32> to vector<256xf32>
    %117 = vector.shape_cast %116 : vector<256xf32> to vector<1x256xf32>
    %118 = vector.broadcast %117 : vector<1x256xf32> to vector<8x256xf32>
    %119 = arith.subf %115, %118 : vector<8x256xf32>
    %120 = math.exp %119 : vector<8x256xf32>
    %cst_56 = arith.constant dense<0.000000e+00> : vector<256xf32>
    %121 = vector.multi_reduction <add>, %120, %cst_56 [0] : vector<8x256xf32> to vector<256xf32>
    %122 = vector.shape_cast %121 : vector<256xf32> to vector<1x256xf32>
    %123 = tpu.reciprocal %122 {approx = true} : vector<1x256xf32> -> vector<1x256xf32>
    %124 = vector.broadcast %123 : vector<1x256xf32> to vector<8x256xf32>
    %125 = arith.mulf %120, %124 : vector<8x256xf32>
    %126 = tpu.concatenate %114, %125 in 0 : vector<8x256xf32>, vector<8x256xf32> -> vector<16x256xf32>
    %cst_57 = arith.constant dense<0.000000e+00> : vector<64x256xf32>
    %127 = tpu.matmul %94, %126, %cst_57 {dimension_numbers = #tpu.dot_dimension_numbers<[0], [0], [1], [1], [0, 1, 1, 1], [], []>} : vector<16x64xf32>, vector<16x256xf32>, vector<64x256xf32> -> vector<64x256xf32>
    %c5 = arith.constant 5 : index
    %c0_58 = arith.constant 0 : index
    %c0_59 = arith.constant 0 : index
    %128 = vector.load %arg8[%c5, %c0_58, %c0_59] : memref<6x64x64xbf16, #tpu.memory_space<vmem>>, vector<1x64x64xbf16>
    %129 = vector.shape_cast %128 : vector<1x64x64xbf16> to vector<64x64xbf16>
    %130 = arith.truncf %127 : vector<64x256xf32> to vector<64x256xbf16>
    %cst_60 = arith.constant dense<0.000000e+00> : vector<64x256xf32>
    %131 = tpu.matmul %129, %130, %cst_60 {dimension_numbers = #tpu.dot_dimension_numbers<[1], [0], [0], [1], [0, 0, 1, 1], [], []>} : vector<64x64xbf16>, vector<64x256xbf16>, vector<64x256xf32> -> vector<64x256xf32>
    %132 = vector.extract_strided_slice %0 {offsets = [0, 2], sizes = [64, 1], strides = [1, 1]} : vector<64x4xf32> to vector<64x1xf32>
    %133 = vector.broadcast %132 : vector<64x1xf32> to vector<64x256xf32>
    %134 = arith.addf %131, %133 : vector<64x256xf32>
    %c0_61 = arith.constant 0 : index
    %c0_62 = arith.constant 0 : index
    %135 = vector.load %arg10[%c0_61, %c0_62] : memref<8x64xbf16, #tpu.memory_space<vmem>>, vector<8x64xbf16>
    %136 = arith.truncf %134 : vector<64x256xf32> to vector<64x256xbf16>
    %cst_63 = arith.constant dense<0.000000e+00> : vector<8x256xf32>
    %137 = tpu.matmul %135, %136, %cst_63 {dimension_numbers = #tpu.dot_dimension_numbers<[1], [0], [0], [1], [0, 0, 1, 1], [], []>} : vector<8x64xbf16>, vector<64x256xbf16>, vector<8x256xf32> -> vector<8x256xf32>
    %138 = arith.addf %48, %137 : vector<8x256xf32>
    %c0_64 = arith.constant 0 : index
    %c0_65 = arith.constant 0 : index
    %c0_66 = arith.constant 0 : index
    %139 = vector.load %arg11[%c0_64, %c0_65, %c0_66] : memref<1x8x256xf32, #tpu.memory_space<vmem>>, vector<1x8x256xf32>
    %140 = vector.shape_cast %139 : vector<1x8x256xf32> to vector<8x256xf32>
    %141 = vector.shape_cast %138 : vector<8x256xf32> to vector<1x8x256xf32>
    tpu.vector_store %arg11[%c0_64, %c0_65, %c0_66], %141 {strides = array<i32>} : memref<1x8x256xf32, #tpu.memory_space<vmem>>, vector<1x8x256xf32>,
    return
  }
  func.func @transform_0(%arg0: i32) -> (i32, i32, i32) {
    %c0_i32 = arith.constant 0 : i32
    %c0_i32_0 = arith.constant 0 : i32
    %c0_i32_1 = arith.constant 0 : i32
    return %arg0, %c0_i32, %c0_i32_0 : i32, i32, i32
  }
  func.func @transform_1(%arg0: i32) -> (i32, i32, i32) {
    %c0_i32 = arith.constant 0 : i32
    %c0_i32_0 = arith.constant 0 : i32
    %c0_i32_1 = arith.constant 0 : i32
    return %arg0, %c0_i32, %c0_i32_0 : i32, i32, i32
  }
  func.func @transform_2(%arg0: i32) -> (i32, i32, i32) {
    %c0_i32 = arith.constant 0 : i32
    %c0_i32_0 = arith.constant 0 : i32
    %c0_i32_1 = arith.constant 0 : i32
    return %arg0, %c0_i32, %c0_i32_0 : i32, i32, i32
  }
  func.func @transform_3(%arg0: i32) -> (i32, i32, i32) {
    %c0_i32 = arith.constant 0 : i32
    %c0_i32_0 = arith.constant 0 : i32
    %c0_i32_1 = arith.constant 0 : i32
    return %arg0, %c0_i32, %c0_i32_0 : i32, i32, i32
  }
  func.func @transform_4(%arg0: i32) -> (i32, i32) {
    %c0_i32 = arith.constant 0 : i32
    %c0_i32_0 = arith.constant 0 : i32
    %c0_i32_1 = arith.constant 0 : i32
    return %c0_i32, %c0_i32_0 : i32, i32
  }
  func.func @transform_5(%arg0: i32) -> (i32, i32) {
    %c0_i32 = arith.constant 0 : i32
    %c0_i32_0 = arith.constant 0 : i32
    %c0_i32_1 = arith.constant 0 : i32
    return %c0_i32, %c0_i32_0 : i32, i32
  }
  func.func @transform_6(%arg0: i32) -> (i32, i32) {
    %c0_i32 = arith.constant 0 : i32
    %c0_i32_0 = arith.constant 0 : i32
    %c0_i32_1 = arith.constant 0 : i32
    return %c0_i32, %c0_i32_0 : i32, i32
  }
  func.func @transform_7(%arg0: i32) -> (i32, i32, i32) {
    %c0_i32 = arith.constant 0 : i32
    %c0_i32_0 = arith.constant 0 : i32
    %c0_i32_1 = arith.constant 0 : i32
    %c0_i32_2 = arith.constant 0 : i32
    return %c0_i32, %c0_i32_0, %c0_i32_1 : i32, i32, i32
  }
  func.func @transform_8(%arg0: i32) -> (i32, i32) {
    %c0_i32 = arith.constant 0 : i32
    %c0_i32_0 = arith.constant 0 : i32
    %c0_i32_1 = arith.constant 0 : i32
    return %c0_i32, %c0_i32_0 : i32, i32
  }
  func.func @transform_9(%arg0: i32) -> (i32, i32) {
    %c0_i32 = arith.constant 0 : i32
    %c0_i32_0 = arith.constant 0 : i32
    %c0_i32_1 = arith.constant 0 : i32
    return %c0_i32, %c0_i32_0 : i32, i32
  }
  func.func @transform_10(%arg0: i32) -> (i32, i32, i32) {
    %c0_i32 = arith.constant 0 : i32
    %c0_i32_0 = arith.constant 0 : i32
    %c0_i32_1 = arith.constant 0 : i32
    return %arg0, %c0_i32, %c0_i32_0 : i32, i32, i32
  }
}

</mosaic_0001>

<llo_original>
// kernel: ip_adapter_forward.1
$region0: #{ip_adapter_forward.1}
  #allocation0 [shape = 'u32[]', space=smem, size = 0x4, offset = 0x4, fixed_abs, tag = 'smem constant byte address 0x4 - core index']
  #allocation1 [shape = 'u32[144,128]{1,0:T(1,128)}', space=vmem, size = 0x12000, scoped, tag = 'internal scratch']
  %s0 = inlined_call_operand.vmem [shape: bf16[2,4,256], index: 0, kind: input, shape index: {}]
  %s1 = inlined_call_operand.vmem [shape: bf16[2,4,128], index: 1, kind: input, shape index: {}]
  %s2 = inlined_call_operand.vmem [shape: bf16[2,8,64], index: 2, kind: input, shape index: {}]
  %s3 = inlined_call_operand.vmem [shape: f32[2,64,1], index: 3, kind: input, shape index: {}]
  %s4 = inlined_call_operand.vmem [shape: bf16[128,64], index: 4, kind: input, shape index: {}]
  %s5 = inlined_call_operand.vmem [shape: f32[6,64], index: 5, kind: input, shape index: {}]
  %s6 = inlined_call_operand.vmem [shape: bf16[64,4], index: 6, kind: input, shape index: {}]
  %s7 = inlined_call_operand.vmem [shape: bf16[6,64,64], index: 7, kind: input, shape index: {}]
  %s8 = inlined_call_operand.vmem [shape: f32[64,4], index: 8, kind: input, shape index: {}]
  %s9 = inlined_call_operand.vmem [shape: bf16[8,64], index: 9, kind: input, shape index: {}]
  %s10 = inlined_call_operand.vmem [shape: f32[2,8,256], index: 10, kind: output, shape index: {}]
  %s11 = sld [smem:[#allocation0]]
  $region73: #{ip_adapter_forward.1} parent=0
    _
  %s13 = ssub.s32 1, %s11
  %s14 = scalar_select 0, %s13, %s11
  loop: start=0, step=1, limit=4
  $region2: #{ip_adapter_forward.1} parent=0 // loop_pre_header
    _
  $region3: #{ip_adapter_forward.1} parent=0 // loop_header
    %s16 = sphi 0, %s20
    %p17 = scmp.ge.s32.totalorder %s16, 4
    %s26 = sphi 0, %s28
    %s29 = sphi 0, %s26
    %s30 = sphi 0, %s29
    %s46 = sphi 0, %s30
    %s52 = sphi 0, %s54
    %s55 = sphi 0, %s52
    %s56 = sphi 0, %s55
    %s72 = sphi 0, %s56
    %s78 = sphi 0, %s80
    %s81 = sphi 0, %s78
    %s82 = sphi 0, %s81
    %s98 = sphi 0, %s82
    %s104 = sphi 0, %s106
    %s107 = sphi 0, %s104
    %s108 = sphi 0, %s107
    %s124 = sphi 0, %s108
    %s128 = sphi 0, %s128
    %s130 = sphi 0, %s128
    %s131 = sphi 0, %s130
    %s145 = sphi 0, %s131
    %s149 = sphi 0, %s149
    %s151 = sphi 0, %s149
    %s152 = sphi 0, %s151
    %s166 = sphi 0, %s152
    %s170 = sphi 0, %s170
    %s172 = sphi 0, %s170
    %s173 = sphi 0, %s172
    %s187 = sphi 0, %s173
    %s191 = sphi 0, %s191
    %s193 = sphi 0, %s191
    %s194 = sphi 0, %s193
    %s208 = sphi 0, %s194
    %s212 = sphi 0, %s212
    %s214 = sphi 0, %s212
    %s215 = sphi 0, %s214
    %s229 = sphi 0, %s215
    %s233 = sphi 0, %s233
    %s235 = sphi 0, %s233
    %s236 = sphi 0, %s235
    %s250 = sphi 0, %s236
    %s256 = sphi 0, %s258
    %s259 = sphi 0, %s256
    %s260 = sphi 0, %s259
    %s276 = sphi 0, %s260
  $region4: #{ip_adapter_forward.1} parent=0 // loop_header_branch
    %19 = sbr.rel (%p17) target = $region8
  $region5: #{ip_adapter_forward.1} parent=0 // loop_body
    %s21 = ssub.s32 %s16, 1
    %s22 = ssub.s32 %s16, 2
    %s23 = sadd.s32 %s16, 1
    %s24 = ssub.s32 %s16, %s23
    %p25 = scmp.eq.s32.totalorder %s24, 0
    %s27 = sadd.s32 %s26, 1
    %s28 = scalar_select %p25, %s26, %s27
    %p31 = pneg %p25
    %p32 = scmp.eq.s32.totalorder %s16, 1
    %p33 = por %p31, %p32
    %p34 = scmp.ne.s32.totalorder %s26, %s29
    %p35 = scmp.eq.s32.totalorder %s16, 0
    %p36 = por %p34, %p35
    %p37 = scmp.ne.s32.totalorder %s26, %s29
    %p38 = scmp.eq.s32.totalorder %s21, 1
    %p39 = por %p37, %p38
    %p40 = scmp.ne.s32.totalorder %s29, %s30
    %p41 = scmp.eq.s32.totalorder %s21, 0
    %p42 = por %p40, %p41
    %p43 = scmp.ne.s32.totalorder %s29, %s30
    %p44 = scmp.eq.s32.totalorder %s22, 1
    %p45 = por %p43, %p44
    %p47 = scmp.ne.s32.totalorder %s30, %s46
    %p48 = scmp.eq.s32.totalorder %s22, 0
    %p49 = por %p47, %p48
    %s50 = ssub.s32 %s16, %s23
    %p51 = scmp.eq.s32.totalorder %s50, 0
    %s53 = sadd.s32 %s52, 1
    %s54 = scalar_select %p51, %s52, %s53
    %p57 = pneg %p51
    %p58 = scmp.eq.s32.totalorder %s16, 1
    %p59 = por %p57, %p58
    %p60 = scmp.ne.s32.totalorder %s52, %s55
    %p61 = scmp.eq.s32.totalorder %s16, 0
    %p62 = por %p60, %p61
    %p63 = scmp.ne.s32.totalorder %s52, %s55
    %p64 = scmp.eq.s32.totalorder %s21, 1
    %p65 = por %p63, %p64
    %p66 = scmp.ne.s32.totalorder %s55, %s56
    %p67 = scmp.eq.s32.totalorder %s21, 0
    %p68 = por %p66, %p67
    %p69 = scmp.ne.s32.totalorder %s55, %s56
    %p70 = scmp.eq.s32.totalorder %s22, 1
    %p71 = por %p69, %p70
    %p73 = scmp.ne.s32.totalorder %s56, %s72
    %p74 = scmp.eq.s32.totalorder %s22, 0
    %p75 = por %p73, %p74
    %s76 = ssub.s32 %s16, %s23
    %p77 = scmp.eq.s32.totalorder %s76, 0
    %s79 = sadd.s32 %s78, 1
    %s80 = scalar_select %p77, %s78, %s79
    %p83 = pneg %p77
    %p84 = scmp.eq.s32.totalorder %s16, 1
    %p85 = por %p83, %p84
    %p86 = scmp.ne.s32.totalorder %s78, %s81
    %p87 = scmp.eq.s32.totalorder %s16, 0
    %p88 = por %p86, %p87
    %p89 = scmp.ne.s32.totalorder %s78, %s81
    %p90 = scmp.eq.s32.totalorder %s21, 1
    %p91 = por %p89, %p90
    %p92 = scmp.ne.s32.totalorder %s81, %s82
    %p93 = scmp.eq.s32.totalorder %s21, 0
    %p94 = por %p92, %p93
    %p95 = scmp.ne.s32.totalorder %s81, %s82
    %p96 = scmp.eq.s32.totalorder %s22, 1
    %p97 = por %p95, %p96
    %p99 = scmp.ne.s32.totalorder %s82, %s98
    %p100 = scmp.eq.s32.totalorder %s22, 0
    %p101 = por %p99, %p100
    %s102 = ssub.s32 %s16, %s23
    %p103 = scmp.eq.s32.totalorder %s102, 0
    %s105 = sadd.s32 %s104, 1
    %s106 = scalar_select %p103, %s104, %s105
    %p109 = pneg %p103
    %p110 = scmp.eq.s32.totalorder %s16, 1
    %p111 = por %p109, %p110
    %p112 = scmp.ne.s32.totalorder %s104, %s107
    %p113 = scmp.eq.s32.totalorder %s16, 0
    %p114 = por %p112, %p113
    %p115 = scmp.ne.s32.totalorder %s104, %s107
    %p116 = scmp.eq.s32.totalorder %s21, 1
    %p117 = por %p115, %p116
    %p118 = scmp.ne.s32.totalorder %s107, %s108
    %p119 = scmp.eq.s32.totalorder %s21, 0
    %p120 = por %p118, %p119
    %p121 = scmp.ne.s32.totalorder %s107, %s108
    %p122 = scmp.eq.s32.totalorder %s22, 1
    %p123 = por %p121, %p122
    %p125 = scmp.ne.s32.totalorder %s108, %s124
    %p126 = scmp.eq.s32.totalorder %s22, 0
    %p127 = por %p125, %p126
    %s129 = sadd.s32 %s128, 1
    %p132 = scmp.eq.s32.totalorder %s16, 1
    %p133 = scmp.ne.s32.totalorder %s128, %s130
    %p134 = scmp.eq.s32.totalorder %s16, 0
    %p135 = por %p133, %p134
    %p136 = scmp.ne.s32.totalorder %s128, %s130
    %p137 = scmp.eq.s32.totalorder %s21, 1
    %p138 = por %p136, %p137
    %p139 = scmp.ne.s32.totalorder %s130, %s131
    %p140 = scmp.eq.s32.totalorder %s21, 0
    %p141 = por %p139, %p140
    %p142 = scmp.ne.s32.totalorder %s130, %s131
    %p143 = scmp.eq.s32.totalorder %s22, 1
    %p144 = por %p142, %p143
    %p146 = scmp.ne.s32.totalorder %s131, %s145
    %p147 = scmp.eq.s32.totalorder %s22, 0
    %p148 = por %p146, %p147
    %s150 = sadd.s32 %s149, 1
    %p153 = scmp.eq.s32.totalorder %s16, 1
    %p154 = scmp.ne.s32.totalorder %s149, %s151
    %p155 = scmp.eq.s32.totalorder %s16, 0
    %p156 = por %p154, %p155
    %p157 = scmp.ne.s32.totalorder %s149, %s151
    %p158 = scmp.eq.s32.totalorder %s21, 1
    %p159 = por %p157, %p158
    %p160 = scmp.ne.s32.totalorder %s151, %s152
    %p161 = scmp.eq.s32.totalorder %s21, 0
    %p162 = por %p160, %p161
    %p163 = scmp.ne.s32.totalorder %s151, %s152
    %p164 = scmp.eq.s32.totalorder %s22, 1
    %p165 = por %p163, %p164
    %p167 = scmp.ne.s32.totalorder %s152, %s166
    %p168 = scmp.eq.s32.totalorder %s22, 0
    %p169 = por %p167, %p168
    %s171 = sadd.s32 %s170, 1
    %p174 = scmp.eq.s32.totalorder %s16, 1
    %p175 = scmp.ne.s32.totalorder %s170, %s172
    %p176 = scmp.eq.s32.totalorder %s16, 0
    %p177 = por %p175, %p176
    %p178 = scmp.ne.s32.totalorder %s170, %s172
    %p179 = scmp.eq.s32.totalorder %s21, 1
    %p180 = por %p178, %p179
    %p181 = scmp.ne.s32.totalorder %s172, %s173
    %p182 = scmp.eq.s32.totalorder %s21, 0
    %p183 = por %p181, %p182
    %p184 = scmp.ne.s32.totalorder %s172, %s173
    %p185 = scmp.eq.s32.totalorder %s22, 1
    %p186 = por %p184, %p185
    %p188 = scmp.ne.s32.totalorder %s173, %s187
    %p189 = scmp.eq.s32.totalorder %s22, 0
    %p190 = por %p188, %p189
    %s192 = sadd.s32 %s191, 1
    %p195 = scmp.eq.s32.totalorder %s16, 1
    %p196 = scmp.ne.s32.totalorder %s191, %s193
    %p197 = scmp.eq.s32.totalorder %s16, 0
    %p198 = por %p196, %p197
    %p199 = scmp.ne.s32.totalorder %s191, %s193
    %p200 = scmp.eq.s32.totalorder %s21, 1
    %p201 = por %p199, %p200
    %p202 = scmp.ne.s32.totalorder %s193, %s194
    %p203 = scmp.eq.s32.totalorder %s21, 0
    %p204 = por %p202, %p203
    %p205 = scmp.ne.s32.totalorder %s193, %s194
    %p206 = scmp.eq.s32.totalorder %s22, 1
    %p207 = por %p205, %p206
    %p209 = scmp.ne.s32.totalorder %s194, %s208
    %p210 = scmp.eq.s32.totalorder %s22, 0
    %p211 = por %p209, %p210
    %s213 = sadd.s32 %s212, 1
    %p216 = scmp.eq.s32.totalorder %s16, 1
    %p217 = scmp.ne.s32.totalorder %s212, %s214
    %p218 = scmp.eq.s32.totalorder %s16, 0
    %p219 = por %p217, %p218
    %p220 = scmp.ne.s32.totalorder %s212, %s214
    %p221 = scmp.eq.s32.totalorder %s21, 1
    %p222 = por %p220, %p221
    %p223 = scmp.ne.s32.totalorder %s214, %s215
    %p224 = scmp.eq.s32.totalorder %s21, 0
    %p225 = por %p223, %p224
    %p226 = scmp.ne.s32.totalorder %s214, %s215
    %p227 = scmp.eq.s32.totalorder %s22, 1
    %p228 = por %p226, %p227
    %p230 = scmp.ne.s32.totalorder %s215, %s229
    %p231 = scmp.eq.s32.totalorder %s22, 0
    %p232 = por %p230, %p231
    %s234 = sadd.s32 %s233, 1
    %p237 = scmp.eq.s32.totalorder %s16, 1
    %p238 = scmp.ne.s32.totalorder %s233, %s235
    %p239 = scmp.eq.s32.totalorder %s16, 0
    %p240 = por %p238, %p239
    %p241 = scmp.ne.s32.totalorder %s233, %s235
    %p242 = scmp.eq.s32.totalorder %s21, 1
    %p243 = por %p241, %p242
    %p244 = scmp.ne.s32.totalorder %s235, %s236
    %p245 = scmp.eq.s32.totalorder %s21, 0
    %p246 = por %p244, %p245
    %p247 = scmp.ne.s32.totalorder %s235, %s236
    %p248 = scmp.eq.s32.totalorder %s22, 1
    %p249 = por %p247, %p248
    %p251 = scmp.ne.s32.totalorder %s236, %s250
    %p252 = scmp.eq.s32.totalorder %s22, 0
    %p253 = por %p251, %p252
    %s254 = ssub.s32 %s16, %s23
    %p255 = scmp.eq.s32.totalorder %s254, 0
    %s257 = sadd.s32 %s256, 1
    %s258 = scalar_select %p255, %s256, %s257
    %p261 = pneg %p255
    %p262 = scmp.eq.s32.totalorder %s16, 1
    %p263 = por %p261, %p262
    %p264 = scmp.ne.s32.totalorder %s256, %s259
    %p265 = scmp.eq.s32.totalorder %s16, 0
    %p266 = por %p264, %p265
    %p267 = scmp.ne.s32.totalorder %s256, %s259
    %p268 = scmp.eq.s32.totalorder %s21, 1
    %p269 = por %p267, %p268
    %p270 = scmp.ne.s32.totalorder %s259, %s260
    %p271 = scmp.eq.s32.totalorder %s21, 0
    %p272 = por %p270, %p271
    %p273 = scmp.ne.s32.totalorder %s259, %s260
    %p274 = scmp.eq.s32.totalorder %s22, 1
    %p275 = por %p273, %p274
    %p277 = scmp.ne.s32.totalorder %s260, %s276
    %p278 = scmp.eq.s32.totalorder %s22, 0
    %p279 = por %p277, %p278
    %p280 = scmp.le.s32.totalorder 1, %s16
    %p281 = scmp.lt.s32.totalorder %s16, 3
    %p282 = pnand %p280, %p281
    %p283 = pneg %p282
    // Predicated region
    $region9: #{ip_adapter_forward.1} parent=5 // pred_check
      _
    $region10: #{ip_adapter_forward.1} parent=5 // pred_check_branch
      %285 = sbr.rel (%p282) target = $region12
    $region11: #{ip_adapter_forward.1} parent=5 // pred_region
      %s286 = ssub.s32 %s16, 1
      // Predicated region
      $region13: #{ip_adapter_forward.1} parent=11 // pred_check
        %p287 = pneg %p141
      $region14: #{ip_adapter_forward.1} parent=11 // pred_check_branch
        %289 = sbr.rel (%p287) target = $region16
      $region15: #{ip_adapter_forward.1} parent=11 // pred_region
        _
      $region16: #{ip_adapter_forward.1} parent=11 // pred_fallthru
        _
      // Predicated region
      $region17: #{ip_adapter_forward.1} parent=11 // pred_check
        %p290 = pneg %p162
      $region18: #{ip_adapter_forward.1} parent=11 // pred_check_branch
        %292 = sbr.rel (%p290) target = $region20
      $region19: #{ip_adapter_forward.1} parent=11 // pred_region
        _
      $region20: #{ip_adapter_forward.1} parent=11 // pred_fallthru
        _
      // Predicated region
      $region21: #{ip_adapter_forward.1} parent=11 // pred_check
        %p293 = pneg %p183
      $region22: #{ip_adapter_forward.1} parent=11 // pred_check_branch
        %295 = sbr.rel (%p293) target = $region24
      $region23: #{ip_adapter_forward.1} parent=11 // pred_region
        _
      $region24: #{ip_adapter_forward.1} parent=11 // pred_fallthru
        _
      // Predicated region
      $region25: #{ip_adapter_forward.1} parent=11 // pred_check
        %p296 = pneg %p204
      $region26: #{ip_adapter_forward.1} parent=11 // pred_check_branch
        %298 = sbr.rel (%p296) target = $region28
      $region27: #{ip_adapter_forward.1} parent=11 // pred_region
        _
      $region28: #{ip_adapter_forward.1} parent=11 // pred_fallthru
        _
      // Predicated region
      $region29: #{ip_adapter_forward.1} parent=11 // pred_check
        %p299 = pneg %p225
      $region30: #{ip_adapter_forward.1} parent=11 // pred_check_branch
        %301 = sbr.rel (%p299) target = $region32
      $region31: #{ip_adapter_forward.1} parent=11 // pred_region
        _
      $region32: #{ip_adapter_forward.1} parent=11 // pred_fallthru
        _
      // Predicated region
      $region33: #{ip_adapter_forward.1} parent=11 // pred_check
        %p302 = pneg %p246
      $region34: #{ip_adapter_forward.1} parent=11 // pred_check_branch
        %304 = sbr.rel (%p302) target = $region36
      $region35: #{ip_adapter_forward.1} parent=11 // pred_region
        _
      $region36: #{ip_adapter_forward.1} parent=11 // pred_fallthru
        _
    $region12: #{ip_adapter_forward.1} parent=5 // pred_fallthru
      _
    %p305 = scmp.lt.s32.totalorder %s16, 2
    // Predicated region
    $region37: #{ip_adapter_forward.1} parent=5 // pred_check
      %p306 = pneg %p305
    $region38: #{ip_adapter_forward.1} parent=5 // pred_check_branch
      %308 = sbr.rel (%p306) target = $region40
    $region39: #{ip_adapter_forward.1} parent=5 // pred_region
      // Predicated region
      $region41: #{ip_adapter_forward.1} parent=39 // pred_check
        %p309 = pneg %p36
      $region42: #{ip_adapter_forward.1} parent=39 // pred_check_branch
        %311 = sbr.rel (%p309) target = $region44
      $region43: #{ip_adapter_forward.1} parent=39 // pred_region
        %p312 = scmp.lt.s32.totalorder %s16, 1
        %s313 = scalar_select %p312, %s16, 1
        %s314 = smul.addr %s313, 2
        %s315 = smul.addr %s314, 2
        %s316 = scalar_lea.vmem %s0, %s315
      $region44: #{ip_adapter_forward.1} parent=39 // pred_fallthru
        _
      // Predicated region
      $region45: #{ip_adapter_forward.1} parent=39 // pred_check
        %p317 = pneg %p62
      $region46: #{ip_adapter_forward.1} parent=39 // pred_check_branch
        %319 = sbr.rel (%p317) target = $region48
      $region47: #{ip_adapter_forward.1} parent=39 // pred_region
        %p320 = scmp.lt.s32.totalorder %s16, 1
        %s321 = scalar_select %p320, %s16, 1
        %s322 = smul.addr %s321, 2
        %s323 = scalar_lea.vmem %s1, %s322
      $region48: #{ip_adapter_forward.1} parent=39 // pred_fallthru
        _
      // Predicated region
      $region49: #{ip_adapter_forward.1} parent=39 // pred_check
        %p324 = pneg %p88
      $region50: #{ip_adapter_forward.1} parent=39 // pred_check_branch
        %326 = sbr.rel (%p324) target = $region52
      $region51: #{ip_adapter_forward.1} parent=39 // pred_region
        %p327 = scmp.lt.s32.totalorder %s16, 1
        %s328 = scalar_select %p327, %s16, 1
        %s329 = smul.addr %s328, 4
        %s330 = scalar_lea.vmem %s2, %s329
      $region52: #{ip_adapter_forward.1} parent=39 // pred_fallthru
        _
      // Predicated region
      $region53: #{ip_adapter_forward.1} parent=39 // pred_check
        %p331 = pneg %p114
      $region54: #{ip_adapter_forward.1} parent=39 // pred_check_branch
        %333 = sbr.rel (%p331) target = $region56
      $region55: #{ip_adapter_forward.1} parent=39 // pred_region
        %p334 = scmp.lt.s32.totalorder %s16, 1
        %s335 = scalar_select %p334, %s16, 1
        %s336 = smul.addr %s335, 8
        %s337 = smul.addr %s336, 8
        %s338 = scalar_lea.vmem %s3, %s337
      $region56: #{ip_adapter_forward.1} parent=39 // pred_fallthru
        _
    $region40: #{ip_adapter_forward.1} parent=5 // pred_fallthru
      _
    %p339 = scmp.le.s32.totalorder 1, %s16
    %p340 = scmp.lt.s32.totalorder %s16, 3
    %p341 = pnand %p339, %p340
    %p342 = pneg %p341
    // Predicated region
    $region57: #{ip_adapter_forward.1} parent=5 // pred_check
      _
    $region58: #{ip_adapter_forward.1} parent=5 // pred_check_branch
      %344 = sbr.rel (%p341) target = $region60
    $region59: #{ip_adapter_forward.1} parent=5 // pred_region
      %s345 = ssub.s32 %s16, 1
      %p346 = scmp.lt.s32.totalorder %s21, 1
      %s347 = scalar_select %p346, %s21, 1
      %s348 = smul.addr %s347, 2
      %s349 = smul.addr %s348, 2
      %s350 = scalar_lea.vmem %s0, %s349
      %p351 = pneg %p42
      %p352 = pneg %p39
      %p353 = scmp.lt.s32.totalorder %s21, 1
      %s354 = scalar_select %p353, %s21, 1
      %s355 = smul.addr %s354, 2
      %s356 = scalar_lea.vmem %s1, %s355
      %p357 = pneg %p68
      %p358 = pneg %p65
      %p359 = scmp.lt.s32.totalorder %s21, 1
      %s360 = scalar_select %p359, %s21, 1
      %s361 = smul.addr %s360, 4
      %s362 = scalar_lea.vmem %s2, %s361
      %p363 = pneg %p94
      %p364 = pneg %p91
      %p365 = scmp.lt.s32.totalorder %s21, 1
      %s366 = scalar_select %p365, %s21, 1
      %s367 = smul.addr %s366, 8
      %s368 = smul.addr %s367, 8
      %s369 = scalar_lea.vmem %s3, %s368
      %p370 = pneg %p120
      %p371 = pneg %p117
      %p372 = pneg %p141
      %p373 = pneg %p138
      %p374 = pneg %p162
      %p375 = pneg %p159
      %p376 = pneg %p183
      %p377 = pneg %p180
      %p378 = pneg %p204
      %p379 = pneg %p201
      %p380 = pneg %p225
      %p381 = pneg %p222
      %p382 = pneg %p246
      %p383 = pneg %p243
      %p384 = pneg %p272
      %p385 = pneg %p269
      %p386 = scmp.lt.s32.totalorder %s21, 1
      %s387 = scalar_select %p386, %s21, 1
      %s388 = smul.addr %s387, 2
      %s389 = smul.addr %s388, 8
      %s390 = scalar_lea.vmem %s10, %s389
      %p391 = scmp.lt.s32.totalorder %s21, 1
      %s392 = scalar_select %p391, %s21, 1
      %s393 = smul.addr %s392, 2
      %s394 = smul.addr %s393, 2
      %s395 = scalar_lea.vmem %s0, %s394
      %p396 = scmp.lt.s32.totalorder %s21, 1
      %s397 = scalar_select %p396, %s21, 1
      %s398 = smul.addr %s397, 2
      %s399 = scalar_lea.vmem %s1, %s398
      %p400 = scmp.lt.s32.totalorder %s21, 1
      %s401 = scalar_select %p400, %s21, 1
      %s402 = smul.addr %s401, 4
      %s403 = scalar_lea.vmem %s2, %s402
      %p404 = scmp.lt.s32.totalorder %s21, 1
      %s405 = scalar_select %p404, %s21, 1
      %s406 = smul.addr %s405, 8
      %s407 = smul.addr %s406, 8
      %s408 = scalar_lea.vmem %s3, %s407
      %p409 = scmp.lt.s32.totalorder %s21, 1
      %s410 = scalar_select %p409, %s21, 1
      %s411 = smul.addr %s410, 2
      %s412 = smul.addr %s411, 8
      %s413 = scalar_lea.vmem %s10, %s412
      %v415 = vld [vmem:[%s8] sm:$0xff]
      %v416 = vld [vmem:[%s8 + $0x8] sm:$0xff]
      %v417 = vld [vmem:[%s8 + $0x10] sm:$0xff]
      %v418 = vld [vmem:[%s8 + $0x18] sm:$0xff]
      %v419 = vld [vmem:[%s8 + $0x20] sm:$0xff]
      %v420 = vld [vmem:[%s8 + $0x28] sm:$0xff]
      %v421 = vld [vmem:[%s8 + $0x30] sm:$0xff]
      %v422 = vld [vmem:[%s8 + $0x38] sm:$0xff]
      %v423 = vld [vmem:[%s5] sm:$0x3f]
      %v424 = vld [vmem:[%s399] sm:$0x3]
      %v425 = vld [vmem:[%s4] sm:$0xf]
      %v426 = vld [vmem:[%s4 + $0x4] sm:$0xf]
      %v427 = vld [vmem:[%s4 + $0x8] sm:$0xf]
      %v428 = vld [vmem:[%s4 + $0xc] sm:$0xf]
      %v429 = vld [vmem:[%s4 + $0x10] sm:$0xf]
      %v430 = vld [vmem:[%s4 + $0x14] sm:$0xf]
      %v431 = vld [vmem:[%s4 + $0x18] sm:$0xf]
      %v432 = vld [vmem:[%s4 + $0x1c] sm:$0xf]
      %v433 = vld [vmem:[%s4 + $0x20] sm:$0xf]
      %v434 = vld [vmem:[%s4 + $0x24] sm:$0xf]
      %v435 = vld [vmem:[%s4 + $0x28] sm:$0xf]
      %v436 = vld [vmem:[%s4 + $0x2c] sm:$0xf]
      %v437 = vld [vmem:[%s4 + $0x30] sm:$0xf]
      %v438 = vld [vmem:[%s4 + $0x34] sm:$0xf]
      %v439 = vld [vmem:[%s4 + $0x38] sm:$0xf]
      %v440 = vld [vmem:[%s4 + $0x3c] sm:$0xf]
      %v457 = vunpack.c.l.b16 %v425
      %v458 = vunpack.c.l.b16 %v426
      %v459 = vunpack.c.l.b16 %v427
      %v460 = vunpack.c.l.b16 %v428
      %v461 = vunpack.c.l.b16 %v429
      %v462 = vunpack.c.l.b16 %v430
      %v463 = vunpack.c.l.b16 %v431
      %v464 = vunpack.c.l.b16 %v432
      %v465 = vunpack.c.l.b16 %v433
      %v466 = vunpack.c.l.b16 %v434
      %v467 = vunpack.c.l.b16 %v435
      %v468 = vunpack.c.l.b16 %v436
      %v469 = vunpack.c.l.b16 %v437
      %v470 = vunpack.c.l.b16 %v438
      %v471 = vunpack.c.l.b16 %v439
      %v472 = vunpack.c.l.b16 %v440
      %v473 = vpack.c.b16 %v458, %v457
      %v474 = vpack.c.b16 %v460, %v459
      %v475 = vpack.c.b16 %v462, %v461
      %v476 = vpack.c.b16 %v464, %v463
      %v477 = vpack.c.b16 %v466, %v465
      %v478 = vpack.c.b16 %v468, %v467
      %v479 = vpack.c.b16 %v470, %v469
      %v480 = vpack.c.b16 %v472, %v471
      %489 = vmatprep.subr.bf16.mxu0 0
      %490 = vmatpush1.bf16.msra.mxu0 %v473
      %491 = vmatprep.subr.bf16.mxu0 0
      %492 = vmatpush1.bf16.msra.mxu0 %v474
      %493 = vmatprep.subr.bf16.mxu0 0
      %494 = vmatpush1.bf16.msra.mxu0 %v475
      %495 = vmatprep.subr.bf16.mxu0 0
      %496 = vmatpush1.bf16.msra.mxu0 %v476
      %497 = vmatprep.subr.bf16.mxu0 0
      %498 = vmatpush1.bf16.msra.mxu0 %v477
      %499 = vmatprep.subr.bf16.mxu0 0
      %500 = vmatpush1.bf16.msra.mxu0 %v478
      %501 = vmatprep.subr.bf16.mxu0 0
      %502 = vmatpush1.bf16.msra.mxu0 %v479
      %503 = vmatprep.subr.bf16.mxu0 0
      %504 = vmatpush1.bf16.msra.mxu0 %v480
      %505 = vmatprep.subr.bf16.mxu0 0
      %506 = vmatpush1.bf16.msra.mxu0 0
      %507 = vmatprep.subr.bf16.mxu0 0
      %508 = vmatpush1.bf16.msra.mxu0 0
      %509 = vmatprep.subr.bf16.mxu0 0
      %510 = vmatpush1.bf16.msra.mxu0 0
      %511 = vmatprep.subr.bf16.mxu0 0
      %512 = vmatpush1.bf16.msra.mxu0 0
      %513 = vmatprep.subr.bf16.mxu0 0
      %514 = vmatpush1.bf16.msra.mxu0 0
      %515 = vmatprep.subr.bf16.mxu0 0
      %516 = vmatpush1.bf16.msra.mxu0 0
      %517 = vmatprep.subr.bf16.mxu0 0
      %518 = vmatpush1.bf16.msra.mxu0 0
      %519 = vmatprep.subr.bf16.mxu0 0
      %520 = vmatpush1.bf16.msra.mxu0 0
      %521 = vmatprep.mubr.bf16.mxu0 0
      %522 = vmatmul.mubr.bf16.gmra.mrb[0].mxu0 %v424
      %v523 = vpop.f32.mrb[0].mxu0
      %v524 = vadd.f32 %v423, %v523
      %v525 = vpop.f32.mrb[0].mxu0
      %v526 = vpop.f32.mrb[0].mxu0
      %v527 = vpop.f32.mrb[0].mxu0
      %528 = vdwg.mxu0
      %vm529 = vcmask 519168
      %v530 = vsel %vm529, %v524, 0.0
      %531 = vadd.xlane.f32.xlu0 %v530
      %v532 = vpop.xlane.xlu0 %531
      %v533 = vmul.f32 %v524, %v524
      %v534 = vsel %vm529, %v533, 0.0
      %535 = vadd.xlane.f32.xlu0 %v534
      %v536 = vpop.xlane.xlu0 %535
      %v537 = vmul.f32 %v532, 0.015625
      %v538 = vmul.f32 %v536, 0.015625
      %v539 = vmul.f32 %v537, %v537
      %v540 = vsub.f32 %v538, %v539
      %v541 = vsub.f32 %v524, %v537
      %v542 = vadd.f32 %v540, 1e-05
      %v543 = vrsqrt.pop %v542
      %v544 = vmul.f32 %v541, %v543
      %v545 = vlaneseq
      %v546 = vshrl.u32 %v545, 7
      %v547 = vsub.s32 4, %v546
      %v548 = vrot.slane %v423, %v547
      %v549 = vmul.f32 %v544, %v548
      %v550 = vlaneseq
      %v551 = vshrl.u32 %v550, 7
      %v552 = vsub.s32 5, %v551
      %v553 = vrot.slane %v423, %v552
      %v554 = vadd.f32 %v549, %v553
      %vm555 = vcmask 1043456
      %v556 = vsel %vm555, %v554, 0.0
      %v557 = vpack.c.bf16 %v556, %v556
      %v558 = vld [vmem:[%s6] sm:$0xf]
      %v559 = vld [vmem:[%s6 + $0x4] sm:$0xf]
      %v560 = vld [vmem:[%s6 + $0x8] sm:$0xf]
      %v561 = vld [vmem:[%s6 + $0xc] sm:$0xf]
      %v562 = vld [vmem:[%s6 + $0x10] sm:$0xf]
      %v563 = vld [vmem:[%s6 + $0x14] sm:$0xf]
      %v564 = vld [vmem:[%s6 + $0x18] sm:$0xf]
      %v565 = vld [vmem:[%s6 + $0x1c] sm:$0xf]
      %v566 = vld [vmem:[%s395] sm:$0xf]
      %v567 = vld [vmem:[%s408] sm:$0xff]
      %v568 = vld [vmem:[%s408 + $0x8] sm:$0xff]
      %v569 = vld [vmem:[%s408 + $0x10] sm:$0xff]
      %v570 = vld [vmem:[%s408 + $0x18] sm:$0xff]
      %v571 = vld [vmem:[%s408 + $0x20] sm:$0xff]
      %v572 = vld [vmem:[%s408 + $0x28] sm:$0xff]
      %v573 = vld [vmem:[%s408 + $0x30] sm:$0xff]
      %v574 = vld [vmem:[%s408 + $0x38] sm:$0xff]
      %576 = vset.pattern.permute.xlu0 0
      %577 = vperm.xlu0 %576, %v567
      %v578 = vpop.permute.xlu0 %577
      %581 = vset.pattern.permute.xlu0 0
      %582 = vperm.xlu0 %581, %v568
      %v583 = vpop.permute.xlu0 %582
      %586 = vset.pattern.permute.xlu0 0
      %587 = vperm.xlu0 %586, %v569
      %v588 = vpop.permute.xlu0 %587
      %591 = vset.pattern.permute.xlu0 0
      %592 = vperm.xlu0 %591, %v570
      %v593 = vpop.permute.xlu0 %592
      %596 = vset.pattern.permute.xlu0 0
      %597 = vperm.xlu0 %596, %v571
      %v598 = vpop.permute.xlu0 %597
      %601 = vset.pattern.permute.xlu0 0
      %602 = vperm.xlu0 %601, %v572
      %v603 = vpop.permute.xlu0 %602
      %606 = vset.pattern.permute.xlu0 0
      %607 = vperm.xlu0 %606, %v573
      %v608 = vpop.permute.xlu0 %607
      %611 = vset.pattern.permute.xlu0 0
      %612 = vperm.xlu0 %611, %v574
      %v613 = vpop.permute.xlu0 %612
      %v623 = vunpack.c.l.b16 %v558
      %v624 = vunpack.c.l.b16 %v559
      %v625 = vunpack.c.l.b16 %v560
      %v626 = vunpack.c.l.b16 %v561
      %v627 = vunpack.c.l.b16 %v562
      %v628 = vunpack.c.l.b16 %v563
      %v629 = vunpack.c.l.b16 %v564
      %v630 = vunpack.c.l.b16 %v565
      %v631 = vpack.c.b16 %v624, %v623
      %v632 = vpack.c.b16 %v626, %v625
      %v633 = vpack.c.b16 %v628, %v627
      %v634 = vpack.c.b16 %v630, %v629
      %v637 = vunpack.c.l.s4 1983009808
      %v638 = vunpack.c.0.s8 %v637
      %v639 = vlaneseq
      %v640 = vshrl.u32 %v639, 7
      %v641 = vsub.s32 %v638, %v640
      %v642 = vrot.slane %v566, %v641
      %v643 = vcombine.high %v642, %v642
      %vm644 = vcmask 31744
      %v646 = vsel %vm644, %v631, 0
      %v649 = vsel %vm644, %v632, 0
      %v652 = vsel %vm644, %v633, 0
      %v655 = vsel %vm644, %v634, 0
      %vm657 = vcmask 1041408
      %v659 = vsel %vm657, %v642, 0
      %v662 = vsel %vm657, %v643, 0
      %664 = vmatprep.subr.bf16.mxu0 %v662
      %665 = vmatpush1.bf16.msra.mxu0 %v659
      %666 = vmatprep.subr.bf16.mxu0 0
      %667 = vmatpush1.bf16.msra.mxu0 0
      %668 = vmatprep.subr.bf16.mxu0 0
      %669 = vmatpush1.bf16.msra.mxu0 0
      %670 = vmatprep.subr.bf16.mxu0 0
      %671 = vmatpush1.bf16.msra.mxu0 0
      %672 = vmatprep.subr.bf16.mxu0 0
      %673 = vmatpush1.bf16.msra.mxu0 0
      %674 = vmatprep.subr.bf16.mxu0 0
      %675 = vmatpush1.bf16.msra.mxu0 0
      %676 = vmatprep.subr.bf16.mxu0 0
      %677 = vmatpush1.bf16.msra.mxu0 0
      %678 = vmatprep.subr.bf16.mxu0 0
      %679 = vmatpush1.bf16.msra.mxu0 0
      %680 = vmatprep.subr.bf16.mxu0 0
      %681 = vmatpush1.bf16.msra.mxu0 0
      %682 = vmatprep.subr.bf16.mxu0 0
      %683 = vmatpush1.bf16.msra.mxu0 0
      %684 = vmatprep.subr.bf16.mxu0 0
      %685 = vmatpush1.bf16.msra.mxu0 0
      %686 = vmatprep.subr.bf16.mxu0 0
      %687 = vmatpush1.bf16.msra.mxu0 0
      %688 = vmatprep.subr.bf16.mxu0 0
      %689 = vmatpush1.bf16.msra.mxu0 0
      %690 = vmatprep.subr.bf16.mxu0 0
      %691 = vmatpush1.bf16.msra.mxu0 0
      %692 = vmatprep.subr.bf16.mxu0 0
      %693 = vmatpush1.bf16.msra.mxu0 0
      %694 = vmatprep.subr.bf16.mxu0 0
      %695 = vmatpush1.bf16.msra.mxu0 0
      %696 = vmatprep.mubr.bf16.mxu0 0
      %697 = vmatmul.mubr.bf16.gmra.mrb[0].mxu0 %v646
      %v698 = vpop.f32.mrb[0].mxu0
      %v699 = vadd.f32 %v578, %v698
      %v700 = vpop.f32.mrb[0].mxu0
      %v701 = vadd.f32 %v578, %v700
      %v702 = vpop.f32.mrb[0].mxu0
      %v703 = vadd.f32 %v583, %v702
      %v704 = vpop.f32.mrb[0].mxu0
      %v705 = vadd.f32 %v583, %v704
      %706 = vmatprep.mubr.bf16.mxu0 0
      %707 = vmatmul.mubr.bf16.gmra.mrb[0].mxu0 %v649
      %v708 = vpop.f32.mrb[0].mxu0
      %v709 = vadd.f32 %v588, %v708
      %v710 = vpop.f32.mrb[0].mxu0
      %v711 = vadd.f32 %v588, %v710
      %v712 = vpop.f32.mrb[0].mxu0
      %v713 = vadd.f32 %v593, %v712
      %v714 = vpop.f32.mrb[0].mxu0
      %v715 = vadd.f32 %v593, %v714
      %716 = vmatprep.mubr.bf16.mxu0 0
      %717 = vmatmul.mubr.bf16.gmra.mrb[0].mxu0 %v652
      %v718 = vpop.f32.mrb[0].mxu0
      %v719 = vadd.f32 %v598, %v718
      %v720 = vpop.f32.mrb[0].mxu0
      %v721 = vadd.f32 %v598, %v720
      %v722 = vpop.f32.mrb[0].mxu0
      %v723 = vadd.f32 %v603, %v722
      %v724 = vpop.f32.mrb[0].mxu0
      %v725 = vadd.f32 %v603, %v724
      %726 = vmatprep.mubr.bf16.mxu0 0
      %727 = vmatmul.mubr.bf16.gmra.mrb[0].mxu0 %v655
      %v728 = vpop.f32.mrb[0].mxu0
      %v729 = vadd.f32 %v608, %v728
      %v730 = vpop.f32.mrb[0].mxu0
      %v731 = vadd.f32 %v608, %v730
      %v732 = vpop.f32.mrb[0].mxu0
      %v733 = vadd.f32 %v613, %v732
      %v734 = vpop.f32.mrb[0].mxu0
      %v735 = vadd.f32 %v613, %v734
      %736 = vdwg.mxu0
      %v737 = vld [vmem:[%s9] sm:$0xf]
      %v738 = vpack.c.bf16 %v703, %v699
      %v739 = vpack.c.bf16 %v705, %v701
      %v740 = vpack.c.bf16 %v713, %v709
      %v741 = vpack.c.bf16 %v715, %v711
      %v742 = vpack.c.bf16 %v723, %v719
      %v743 = vpack.c.bf16 %v725, %v721
      %v744 = vpack.c.bf16 %v733, %v729
      %v745 = vpack.c.bf16 %v735, %v731
      %747 = vset.pattern.permute.xlu0 3
      %748 = vperm.xlu0 %747, %v415
      %v749 = vpop.permute.xlu0 %748
      %vm751 = vcmask 523264
      %v753 = vsel %vm751, %v737, 0
      %755 = vmatprep.subr.bf16.mxu0 %v739
      %756 = vmatpush1.bf16.msra.mxu0 %v738
      %757 = vmatprep.subr.bf16.mxu0 %v741
      %758 = vmatpush1.bf16.msra.mxu0 %v740
      %759 = vmatprep.subr.bf16.mxu0 %v743
      %760 = vmatpush1.bf16.msra.mxu0 %v742
      %761 = vmatprep.subr.bf16.mxu0 %v745
      %762 = vmatpush1.bf16.msra.mxu0 %v744
      %763 = vmatprep.subr.bf16.mxu0 0
      %764 = vmatpush1.bf16.msra.mxu0 0
      %765 = vmatprep.subr.bf16.mxu0 0
      %766 = vmatpush1.bf16.msra.mxu0 0
      %767 = vmatprep.subr.bf16.mxu0 0
      %768 = vmatpush1.bf16.msra.mxu0 0
      %769 = vmatprep.subr.bf16.mxu0 0
      %770 = vmatpush1.bf16.msra.mxu0 0
      %771 = vmatprep.subr.bf16.mxu0 0
      %772 = vmatpush1.bf16.msra.mxu0 0
      %773 = vmatprep.subr.bf16.mxu0 0
      %774 = vmatpush1.bf16.msra.mxu0 0
      %775 = vmatprep.subr.bf16.mxu0 0
      %776 = vmatpush1.bf16.msra.mxu0 0
      %777 = vmatprep.subr.bf16.mxu0 0
      %778 = vmatpush1.bf16.msra.mxu0 0
      %779 = vmatprep.subr.bf16.mxu0 0
      %780 = vmatpush1.bf16.msra.mxu0 0
      %781 = vmatprep.subr.bf16.mxu0 0
      %782 = vmatpush1.bf16.msra.mxu0 0
      %783 = vmatprep.subr.bf16.mxu0 0
      %784 = vmatpush1.bf16.msra.mxu0 0
      %785 = vmatprep.subr.bf16.mxu0 0
      %786 = vmatpush1.bf16.msra.mxu0 0
      %787 = vmatprep.mubr.bf16.mxu0 0
      %788 = vmatmul.mubr.bf16.gmra.mrb[0].mxu0 %v753
      %v789 = vpop.f32.mrb[0].mxu0
      %v790 = vadd.f32 %v749, %v789
      %v791 = vpop.f32.mrb[0].mxu0
      %v792 = vadd.f32 %v749, %v791
      %v793 = vpop.f32.mrb[0].mxu0
      %v794 = vpop.f32.mrb[0].mxu0
      %795 = vdwg.mxu0
      %v796 = vadd.f32 %v699, %v703
      %v797 = vadd.f32 %v796, %v709
      %v798 = vadd.f32 %v797, %v713
      %v799 = vadd.f32 %v798, %v719
      %v800 = vadd.f32 %v799, %v723
      %v801 = vadd.f32 %v800, %v729
      %v802 = vadd.f32 %v801, %v733
      %v803 = vrot.slane %v802, 4
      %v804 = vadd.f32 %v802, %v803
      %v805 = vrot.slane %v804, 2
      %v806 = vadd.f32 %v804, %v805
      %v807 = vrot.slane %v806, 1
      %v808 = vadd.f32 %v806, %v807
      %v809 = vadd.f32 %v701, %v705
      %v810 = vadd.f32 %v809, %v711
      %v811 = vadd.f32 %v810, %v715
      %v812 = vadd.f32 %v811, %v721
      %v813 = vadd.f32 %v812, %v725
      %v814 = vadd.f32 %v813, %v731
      %v815 = vadd.f32 %v814, %v735
      %v816 = vrot.slane %v815, 4
      %v817 = vadd.f32 %v815, %v816
      %v818 = vrot.slane %v817, 2
      %v819 = vadd.f32 %v817, %v818
      %v820 = vrot.slane %v819, 1
      %v821 = vadd.f32 %v819, %v820
      %v822 = vmul.f32 %v699, %v699
      %v823 = vmul.f32 %v701, %v701
      %v824 = vmul.f32 %v703, %v703
      %v825 = vmul.f32 %v705, %v705
      %v826 = vmul.f32 %v709, %v709
      %v827 = vmul.f32 %v711, %v711
      %v828 = vmul.f32 %v713, %v713
      %v829 = vmul.f32 %v715, %v715
      %v830 = vmul.f32 %v719, %v719
      %v831 = vmul.f32 %v721, %v721
      %v832 = vmul.f32 %v723, %v723
      %v833 = vmul.f32 %v725, %v725
      %v834 = vmul.f32 %v729, %v729
      %v835 = vmul.f32 %v731, %v731
      %v836 = vmul.f32 %v733, %v733
      %v837 = vmul.f32 %v735, %v735
      %v838 = vadd.f32 %v822, %v824
      %v839 = vadd.f32 %v838, %v826
      %v840 = vadd.f32 %v839, %v828
      %v841 = vadd.f32 %v840, %v830
      %v842 = vadd.f32 %v841, %v832
      %v843 = vadd.f32 %v842, %v834
      %v844 = vadd.f32 %v843, %v836
      %v845 = vrot.slane %v844, 4
      %v846 = vadd.f32 %v844, %v845
      %v847 = vrot.slane %v846, 2
      %v848 = vadd.f32 %v846, %v847
      %v849 = vrot.slane %v848, 1
      %v850 = vadd.f32 %v848, %v849
      %v851 = vadd.f32 %v823, %v825
      %v852 = vadd.f32 %v851, %v827
      %v853 = vadd.f32 %v852, %v829
      %v854 = vadd.f32 %v853, %v831
      %v855 = vadd.f32 %v854, %v833
      %v856 = vadd.f32 %v855, %v835
      %v857 = vadd.f32 %v856, %v837
      %v858 = vrot.slane %v857, 4
      %v859 = vadd.f32 %v857, %v858
      %v860 = vrot.slane %v859, 2
      %v861 = vadd.f32 %v859, %v860
      %v862 = vrot.slane %v861, 1
      %v863 = vadd.f32 %v861, %v862
      %v864 = vmul.f32 %v808, 0.015625
      %v865 = vmul.f32 %v821, 0.015625
      %v866 = vmul.f32 %v850, 0.015625
      %v867 = vmul.f32 %v863, 0.015625
      %v868 = vmul.f32 %v864, %v864
      %v869 = vmul.f32 %v865, %v865
      %v870 = vsub.f32 %v866, %v868
      %v871 = vsub.f32 %v867, %v869
      %v872 = vsub.f32 %v699, %v864
      %v873 = vsub.f32 %v701, %v865
      %v874 = vsub.f32 %v703, %v864
      %v875 = vsub.f32 %v705, %v865
      %v876 = vsub.f32 %v709, %v864
      %v877 = vsub.f32 %v711, %v865
      %v878 = vsub.f32 %v713, %v864
      %v879 = vsub.f32 %v715, %v865
      %v880 = vsub.f32 %v719, %v864
      %v881 = vsub.f32 %v721, %v865
      %v882 = vsub.f32 %v723, %v864
      %v883 = vsub.f32 %v725, %v865
      %v884 = vsub.f32 %v729, %v864
      %v885 = vsub.f32 %v731, %v865
      %v886 = vsub.f32 %v733, %v864
      %v887 = vsub.f32 %v735, %v865
      %v888 = vadd.f32 %v870, 1e-05
      %v889 = vadd.f32 %v871, 1e-05
      %v890 = vrsqrt.pop %v888
      %v891 = vrsqrt.pop %v889
      %v892 = vmul.f32 %v872, %v890
      %v893 = vmul.f32 %v873, %v891
      %v894 = vmul.f32 %v874, %v890
      %v895 = vmul.f32 %v875, %v891
      %v896 = vmul.f32 %v876, %v890
      %v897 = vmul.f32 %v877, %v891
      %v898 = vmul.f32 %v878, %v890
      %v899 = vmul.f32 %v879, %v891
      %v900 = vmul.f32 %v880, %v890
      %v901 = vmul.f32 %v881, %v891
      %v902 = vmul.f32 %v882, %v890
      %v903 = vmul.f32 %v883, %v891
      %v904 = vmul.f32 %v884, %v890
      %v905 = vmul.f32 %v885, %v891
      %v906 = vmul.f32 %v886, %v890
      %v907 = vmul.f32 %v887, %v891
      %908 = vset.pattern.permute.xlu0 0
      %909 = vperm.xlu0 %908, %v415
      %v910 = vpop.permute.xlu0 %909
      %913 = vset.pattern.permute.xlu0 0
      %914 = vperm.xlu0 %913, %v416
      %v915 = vpop.permute.xlu0 %914
      %918 = vset.pattern.permute.xlu0 0
      %919 = vperm.xlu0 %918, %v417
      %v920 = vpop.permute.xlu0 %919
      %923 = vset.pattern.permute.xlu0 0
      %924 = vperm.xlu0 %923, %v418
      %v925 = vpop.permute.xlu0 %924
      %928 = vset.pattern.permute.xlu0 0
      %929 = vperm.xlu0 %928, %v419
      %v930 = vpop.permute.xlu0 %929
      %933 = vset.pattern.permute.xlu0 0
      %934 = vperm.xlu0 %933, %v420
      %v935 = vpop.permute.xlu0 %934
      %938 = vset.pattern.permute.xlu0 0
      %939 = vperm.xlu0 %938, %v421
      %v940 = vpop.permute.xlu0 %939
      %943 = vset.pattern.permute.xlu0 0
      %944 = vperm.xlu0 %943, %v422
      %v945 = vpop.permute.xlu0 %944
      %v947 = vmul.f32 %v892, %v910
      %v948 = vmul.f32 %v893, %v910
      %v949 = vmul.f32 %v894, %v915
      %v950 = vmul.f32 %v895, %v915
      %v951 = vmul.f32 %v896, %v920
      %v952 = vmul.f32 %v897, %v920
      %v953 = vmul.f32 %v898, %v925
      %v954 = vmul.f32 %v899, %v925
      %v955 = vmul.f32 %v900, %v930
      %v956 = vmul.f32 %v901, %v930
      %v957 = vmul.f32 %v902, %v935
      %v958 = vmul.f32 %v903, %v935
      %v959 = vmul.f32 %v904, %v940
      %v960 = vmul.f32 %v905, %v940
      %v961 = vmul.f32 %v906, %v945
      %v962 = vmul.f32 %v907, %v945
      %963 = vset.pattern.permute.xlu0 1
      %964 = vperm.xlu0 %963, %v415
      %v965 = vpop.permute.xlu0 %964
      %967 = vset.pattern.permute.xlu0 1
      %968 = vperm.xlu0 %967, %v416
      %v969 = vpop.permute.xlu0 %968
      %971 = vset.pattern.permute.xlu0 1
      %972 = vperm.xlu0 %971, %v417
      %v973 = vpop.permute.xlu0 %972
      %975 = vset.pattern.permute.xlu0 1
      %976 = vperm.xlu0 %975, %v418
      %v977 = vpop.permute.xlu0 %976
      %979 = vset.pattern.permute.xlu0 1
      %980 = vperm.xlu0 %979, %v419
      %v981 = vpop.permute.xlu0 %980
      %983 = vset.pattern.permute.xlu0 1
      %984 = vperm.xlu0 %983, %v420
      %v985 = vpop.permute.xlu0 %984
      %987 = vset.pattern.permute.xlu0 1
      %988 = vperm.xlu0 %987, %v421
      %v989 = vpop.permute.xlu0 %988
      %991 = vset.pattern.permute.xlu0 1
      %992 = vperm.xlu0 %991, %v422
      %v993 = vpop.permute.xlu0 %992
      %v995 = vadd.f32 %v947, %v965
      %v996 = vadd.f32 %v948, %v965
      %v997 = vadd.f32 %v949, %v969
      %v998 = vadd.f32 %v950, %v969
      %v999 = vadd.f32 %v951, %v973
      %v1000 = vadd.f32 %v952, %v973
      %v1001 = vadd.f32 %v953, %v977
      %v1002 = vadd.f32 %v954, %v977
      %v1003 = vadd.f32 %v955, %v981
      %v1004 = vadd.f32 %v956, %v981
      %v1005 = vadd.f32 %v957, %v985
      %v1006 = vadd.f32 %v958, %v985
      %v1007 = vadd.f32 %v959, %v989
      %v1008 = vadd.f32 %v960, %v989
      %v1009 = vadd.f32 %v961, %v993
      %v1010 = vadd.f32 %v962, %v993
      %v1011 = vld [vmem:[%s7] sm:$0xf]
      %v1012 = vld [vmem:[%s7 + $0x4] sm:$0xf]
      %v1013 = vld [vmem:[%s7 + $0x8] sm:$0xf]
      %v1014 = vld [vmem:[%s7 + $0xc] sm:$0xf]
      %v1015 = vld [vmem:[%s7 + $0x10] sm:$0xf]
      %v1016 = vld [vmem:[%s7 + $0x14] sm:$0xf]
      %v1017 = vld [vmem:[%s7 + $0x18] sm:$0xf]
      %v1018 = vld [vmem:[%s7 + $0x1c] sm:$0xf]
      %v1019 = vpack.c.bf16 %v997, %v995
      %v1020 = vpack.c.bf16 %v998, %v996
      %v1021 = vpack.c.bf16 %v1001, %v999
      %v1022 = vpack.c.bf16 %v1002, %v1000
      %v1023 = vpack.c.bf16 %v1005, %v1003
      %v1024 = vpack.c.bf16 %v1006, %v1004
      %v1025 = vpack.c.bf16 %v1009, %v1007
      %v1026 = vpack.c.bf16 %v1010, %v1008
      %v1035 = vunpack.c.l.b16 %v1011
      %v1036 = vunpack.c.l.b16 %v1012
      %v1037 = vunpack.c.l.b16 %v1013
      %v1038 = vunpack.c.l.b16 %v1014
      %v1039 = vunpack.c.l.b16 %v1015
      %v1040 = vunpack.c.l.b16 %v1016
      %v1041 = vunpack.c.l.b16 %v1017
      %v1042 = vunpack.c.l.b16 %v1018
      %v1043 = vpack.c.b16 %v1036, %v1035
      %v1044 = vpack.c.b16 %v1038, %v1037
      %v1045 = vpack.c.b16 %v1040, %v1039
      %v1046 = vpack.c.b16 %v1042, %v1041
      %v1048 = vsel %vm751, %v1043, 0
      %v1051 = vsel %vm751, %v1044, 0
      %v1054 = vsel %vm751, %v1045, 0
      %v1057 = vsel %vm751, %v1046, 0
      %1059 = vmatprep.subr.bf16.mxu0 %v1020
      %1060 = vmatpush1.bf16.msra.mxu0 %v1019
      %1061 = vmatprep.subr.bf16.mxu0 %v1022
      %1062 = vmatpush1.bf16.msra.mxu0 %v1021
      %1063 = vmatprep.subr.bf16.mxu0 %v1024
      %1064 = vmatpush1.bf16.msra.mxu0 %v1023
      %1065 = vmatprep.subr.bf16.mxu0 %v1026
      %1066 = vmatpush1.bf16.msra.mxu0 %v1025
      %1067 = vmatprep.subr.bf16.mxu0 0
      %1068 = vmatpush1.bf16.msra.mxu0 0
      %1069 = vmatprep.subr.bf16.mxu0 0
      %1070 = vmatpush1.bf16.msra.mxu0 0
      %1071 = vmatprep.subr.bf16.mxu0 0
      %1072 = vmatpush1.bf16.msra.mxu0 0
      %1073 = vmatprep.subr.bf16.mxu0 0
      %1074 = vmatpush1.bf16.msra.mxu0 0
      %1075 = vmatprep.subr.bf16.mxu0 0
      %1076 = vmatpush1.bf16.msra.mxu0 0
      %1077 = vmatprep.subr.bf16.mxu0 0
      %1078 = vmatpush1.bf16.msra.mxu0 0
      %1079 = vmatprep.subr.bf16.mxu0 0
      %1080 = vmatpush1.bf16.msra.mxu0 0
      %1081 = vmatprep.subr.bf16.mxu0 0
      %1082 = vmatpush1.bf16.msra.mxu0 0
      %1083 = vmatprep.subr.bf16.mxu0 0
      %1084 = vmatpush1.bf16.msra.mxu0 0
      %1085 = vmatprep.subr.bf16.mxu0 0
      %1086 = vmatpush1.bf16.msra.mxu0 0
      %1087 = vmatprep.subr.bf16.mxu0 0
      %1088 = vmatpush1.bf16.msra.mxu0 0
      %1089 = vmatprep.subr.bf16.mxu0 0
      %1090 = vmatpush1.bf16.msra.mxu0 0
      %1091 = vmatprep.mubr.bf16.mxu0 0
      %1092 = vmatmul.mubr.bf16.gmra.mrb[0].mxu0 %v1048
      %v1093 = vpop.f32.mrb[0].mxu0
      %v1094 = vadd.f32 0.0, %v1093
      %v1095 = vpop.f32.mrb[0].mxu0
      %v1096 = vadd.f32 0.0, %v1095
      %v1097 = vpop.f32.mrb[0].mxu0
      %v1098 = vadd.f32 0.0, %v1097
      %v1099 = vpop.f32.mrb[0].mxu0
      %v1100 = vadd.f32 0.0, %v1099
      %1101 = vmatprep.mubr.bf16.mxu0 0
      %1102 = vmatmul.mubr.bf16.gmra.mrb[0].mxu0 %v1051
      %v1103 = vpop.f32.mrb[0].mxu0
      %v1104 = vadd.f32 0.0, %v1103
      %v1105 = vpop.f32.mrb[0].mxu0
      %v1106 = vadd.f32 0.0, %v1105
      %v1107 = vpop.f32.mrb[0].mxu0
      %v1108 = vadd.f32 0.0, %v1107
      %v1109 = vpop.f32.mrb[0].mxu0
      %v1110 = vadd.f32 0.0, %v1109
      %1111 = vmatprep.mubr.bf16.mxu0 0
      %1112 = vmatmul.mubr.bf16.gmra.mrb[0].mxu0 %v1054
      %v1113 = vpop.f32.mrb[0].mxu0
      %v1114 = vadd.f32 0.0, %v1113
      %v1115 = vpop.f32.mrb[0].mxu0
      %v1116 = vadd.f32 0.0, %v1115
      %v1117 = vpop.f32.mrb[0].mxu0
      %v1118 = vadd.f32 0.0, %v1117
      %v1119 = vpop.f32.mrb[0].mxu0
      %v1120 = vadd.f32 0.0, %v1119
      %1121 = vmatprep.mubr.bf16.mxu0 0
      %1122 = vmatmul.mubr.bf16.gmra.mrb[0].mxu0 %v1057
      %v1123 = vpop.f32.mrb[0].mxu0
      %v1124 = vadd.f32 0.0, %v1123
      %v1125 = vpop.f32.mrb[0].mxu0
      %v1126 = vadd.f32 0.0, %v1125
      %v1127 = vpop.f32.mrb[0].mxu0
      %v1128 = vadd.f32 0.0, %v1127
      %v1129 = vpop.f32.mrb[0].mxu0
      %v1130 = vadd.f32 0.0, %v1129
      %1131 = vdwg.mxu0
      %v1132 = vpack.c.bf16 %v1098, %v1094
      %v1133 = vpack.c.bf16 %v1100, %v1096
      %v1134 = vpack.c.bf16 %v1108, %v1104
      %v1135 = vpack.c.bf16 %v1110, %v1106
      %v1136 = vpack.c.bf16 %v1118, %v1114
      %v1137 = vpack.c.bf16 %v1120, %v1116
      %v1138 = vpack.c.bf16 %v1128, %v1124
      %v1139 = vpack.c.bf16 %v1130, %v1126
      %v1140 = vld [vmem:[%s403] sm:$0xf]
      %s1141 = scalar_lea.vmem %s7, 32
      %v1142 = vld [vmem:[%s1141] sm:$0xf]
      %v1143 = vld [vmem:[%s1141 + $0x4] sm:$0xf]
      %v1144 = vld [vmem:[%s1141 + $0x8] sm:$0xf]
      %v1145 = vld [vmem:[%s1141 + $0xc] sm:$0xf]
      %v1146 = vld [vmem:[%s1141 + $0x10] sm:$0xf]
      %v1147 = vld [vmem:[%s1141 + $0x14] sm:$0xf]
      %v1148 = vld [vmem:[%s1141 + $0x18] sm:$0xf]
      %v1149 = vld [vmem:[%s1141 + $0x1c] sm:$0xf]
      %v1158 = vunpack.c.l.b16 %v1142
      %v1159 = vunpack.c.l.b16 %v1143
      %v1160 = vunpack.c.l.b16 %v1144
      %v1161 = vunpack.c.l.b16 %v1145
      %v1162 = vunpack.c.l.b16 %v1146
      %v1163 = vunpack.c.l.b16 %v1147
      %v1164 = vunpack.c.l.b16 %v1148
      %v1165 = vunpack.c.l.b16 %v1149
      %v1166 = vpack.c.b16 %v1159, %v1158
      %v1167 = vpack.c.b16 %v1161, %v1160
      %v1168 = vpack.c.b16 %v1163, %v1162
      %v1169 = vpack.c.b16 %v1165, %v1164
      %v1175 = vsel %vm751, %v1140, 0
      %1177 = vmatprep.subr.bf16.mxu0 0
      %1178 = vmatpush1.bf16.msra.mxu0 %v1166
      %1179 = vmatprep.subr.bf16.mxu0 0
      %1180 = vmatpush1.bf16.msra.mxu0 %v1167
      %1181 = vmatprep.subr.bf16.mxu0 0
      %1182 = vmatpush1.bf16.msra.mxu0 %v1168
      %1183 = vmatprep.subr.bf16.mxu0 0
      %1184 = vmatpush1.bf16.msra.mxu0 %v1169
      %1185 = vmatprep.subr.bf16.mxu0 0
      %1186 = vmatpush1.bf16.msra.mxu0 0
      %1187 = vmatprep.subr.bf16.mxu0 0
      %1188 = vmatpush1.bf16.msra.mxu0 0
      %1189 = vmatprep.subr.bf16.mxu0 0
      %1190 = vmatpush1.bf16.msra.mxu0 0
      %1191 = vmatprep.subr.bf16.mxu0 0
      %1192 = vmatpush1.bf16.msra.mxu0 0
      %1193 = vmatprep.subr.bf16.mxu0 0
      %1194 = vmatpush1.bf16.msra.mxu0 0
      %1195 = vmatprep.subr.bf16.mxu0 0
      %1196 = vmatpush1.bf16.msra.mxu0 0
      %1197 = vmatprep.subr.bf16.mxu0 0
      %1198 = vmatpush1.bf16.msra.mxu0 0
      %1199 = vmatprep.subr.bf16.mxu0 0
      %1200 = vmatpush1.bf16.msra.mxu0 0
      %1201 = vmatprep.subr.bf16.mxu0 0
      %1202 = vmatpush1.bf16.msra.mxu0 0
      %1203 = vmatprep.subr.bf16.mxu0 0
      %1204 = vmatpush1.bf16.msra.mxu0 0
      %1205 = vmatprep.subr.bf16.mxu0 0
      %1206 = vmatpush1.bf16.msra.mxu0 0
      %1207 = vmatprep.subr.bf16.mxu0 0
      %1208 = vmatpush1.bf16.msra.mxu0 0
      %1209 = vmatprep.mubr.bf16.mxu0 0
      %1210 = vmatmul.mubr.bf16.gmra.mrb[0].mxu0 %v1175
      %v1211 = vpop.f32.mrb[0].mxu0
      %v1212 = vadd.f32 0.0, %v1211
      %v1213 = vpop.f32.mrb[0].mxu0
      %v1214 = vpop.f32.mrb[0].mxu0
      %v1215 = vpop.f32.mrb[0].mxu0
      %1216 = vdwg.mxu0
      %s1217 = scalar_lea.vmem %s7, 96
      %v1218 = vld [vmem:[%s1217] sm:$0xf]
      %v1219 = vld [vmem:[%s1217 + $0x4] sm:$0xf]
      %v1220 = vld [vmem:[%s1217 + $0x8] sm:$0xf]
      %v1221 = vld [vmem:[%s1217 + $0xc] sm:$0xf]
      %v1222 = vld [vmem:[%s1217 + $0x10] sm:$0xf]
      %v1223 = vld [vmem:[%s1217 + $0x14] sm:$0xf]
      %v1224 = vld [vmem:[%s1217 + $0x18] sm:$0xf]
      %v1225 = vld [vmem:[%s1217 + $0x1c] sm:$0xf]
      %v1234 = vunpack.c.l.b16 %v1218
      %v1235 = vunpack.c.l.b16 %v1219
      %v1236 = vunpack.c.l.b16 %v1220
      %v1237 = vunpack.c.l.b16 %v1221
      %v1238 = vunpack.c.l.b16 %v1222
      %v1239 = vunpack.c.l.b16 %v1223
      %v1240 = vunpack.c.l.b16 %v1224
      %v1241 = vunpack.c.l.b16 %v1225
      %v1242 = vpack.c.b16 %v1235, %v1234
      %v1243 = vpack.c.b16 %v1237, %v1236
      %v1244 = vpack.c.b16 %v1239, %v1238
      %v1245 = vpack.c.b16 %v1241, %v1240
      %v1251 = vsel %vm751, %v557, 0
      %1253 = vmatprep.subr.bf16.mxu0 0
      %1254 = vmatpush1.bf16.msra.mxu0 %v1242
      %1255 = vmatprep.subr.bf16.mxu0 0
      %1256 = vmatpush1.bf16.msra.mxu0 %v1243
      %1257 = vmatprep.subr.bf16.mxu0 0
      %1258 = vmatpush1.bf16.msra.mxu0 %v1244
      %1259 = vmatprep.subr.bf16.mxu0 0
      %1260 = vmatpush1.bf16.msra.mxu0 %v1245
      %1261 = vmatprep.subr.bf16.mxu0 0
      %1262 = vmatpush1.bf16.msra.mxu0 0
      %1263 = vmatprep.subr.bf16.mxu0 0
      %1264 = vmatpush1.bf16.msra.mxu0 0
      %1265 = vmatprep.subr.bf16.mxu0 0
      %1266 = vmatpush1.bf16.msra.mxu0 0
      %1267 = vmatprep.subr.bf16.mxu0 0
      %1268 = vmatpush1.bf16.msra.mxu0 0
      %1269 = vmatprep.subr.bf16.mxu0 0
      %1270 = vmatpush1.bf16.msra.mxu0 0
      %1271 = vmatprep.subr.bf16.mxu0 0
      %1272 = vmatpush1.bf16.msra.mxu0 0
      %1273 = vmatprep.subr.bf16.mxu0 0
      %1274 = vmatpush1.bf16.msra.mxu0 0
      %1275 = vmatprep.subr.bf16.mxu0 0
      %1276 = vmatpush1.bf16.msra.mxu0 0
      %1277 = vmatprep.subr.bf16.mxu0 0
      %1278 = vmatpush1.bf16.msra.mxu0 0
      %1279 = vmatprep.subr.bf16.mxu0 0
      %1280 = vmatpush1.bf16.msra.mxu0 0
      %1281 = vmatprep.subr.bf16.mxu0 0
      %1282 = vmatpush1.bf16.msra.mxu0 0
      %1283 = vmatprep.subr.bf16.mxu0 0
      %1284 = vmatpush1.bf16.msra.mxu0 0
      %1285 = vmatprep.mubr.bf16.mxu0 0
      %1286 = vmatmul.mubr.bf16.gmra.mrb[0].mxu0 %v1251
      %v1287 = vpop.f32.mrb[0].mxu0
      %v1288 = vadd.f32 0.0, %v1287
      %v1289 = vpop.f32.mrb[0].mxu0
      %v1290 = vpop.f32.mrb[0].mxu0
      %v1291 = vpop.f32.mrb[0].mxu0
      %1292 = vdwg.mxu0
      %v1293 = vpack.c.bf16 %v1288, %v1212
      %s1294 = scalar_lea.vmem %s7, 64
      %v1295 = vld [vmem:[%s1294] sm:$0xf]
      %v1296 = vld [vmem:[%s1294 + $0x4] sm:$0xf]
      %v1297 = vld [vmem:[%s1294 + $0x8] sm:$0xf]
      %v1298 = vld [vmem:[%s1294 + $0xc] sm:$0xf]
      %v1299 = vld [vmem:[%s1294 + $0x10] sm:$0xf]
      %v1300 = vld [vmem:[%s1294 + $0x14] sm:$0xf]
      %v1301 = vld [vmem:[%s1294 + $0x18] sm:$0xf]
      %v1302 = vld [vmem:[%s1294 + $0x1c] sm:$0xf]
      %v1311 = vunpack.c.l.b16 %v1295
      %v1312 = vunpack.c.l.b16 %v1296
      %v1313 = vunpack.c.l.b16 %v1297
      %v1314 = vunpack.c.l.b16 %v1298
      %v1315 = vunpack.c.l.b16 %v1299
      %v1316 = vunpack.c.l.b16 %v1300
      %v1317 = vunpack.c.l.b16 %v1301
      %v1318 = vunpack.c.l.b16 %v1302
      %v1319 = vpack.c.b16 %v1312, %v1311
      %v1320 = vpack.c.b16 %v1314, %v1313
      %v1321 = vpack.c.b16 %v1316, %v1315
      %v1322 = vpack.c.b16 %v1318, %v1317
      %1327 = vmatprep.subr.bf16.mxu0 0
      %1328 = vmatpush1.bf16.msra.mxu0 %v1319
      %1329 = vmatprep.subr.bf16.mxu0 0
      %1330 = vmatpush1.bf16.msra.mxu0 %v1320
      %1331 = vmatprep.subr.bf16.mxu0 0
      %1332 = vmatpush1.bf16.msra.mxu0 %v1321
      %1333 = vmatprep.subr.bf16.mxu0 0
      %1334 = vmatpush1.bf16.msra.mxu0 %v1322
      %1335 = vmatprep.subr.bf16.mxu0 0
      %1336 = vmatpush1.bf16.msra.mxu0 0
      %1337 = vmatprep.subr.bf16.mxu0 0
      %1338 = vmatpush1.bf16.msra.mxu0 0
      %1339 = vmatprep.subr.bf16.mxu0 0
      %1340 = vmatpush1.bf16.msra.mxu0 0
      %1341 = vmatprep.subr.bf16.mxu0 0
      %1342 = vmatpush1.bf16.msra.mxu0 0
      %1343 = vmatprep.subr.bf16.mxu0 0
      %1344 = vmatpush1.bf16.msra.mxu0 0
      %1345 = vmatprep.subr.bf16.mxu0 0
      %1346 = vmatpush1.bf16.msra.mxu0 0
      %1347 = vmatprep.subr.bf16.mxu0 0
      %1348 = vmatpush1.bf16.msra.mxu0 0
      %1349 = vmatprep.subr.bf16.mxu0 0
      %1350 = vmatpush1.bf16.msra.mxu0 0
      %1351 = vmatprep.subr.bf16.mxu0 0
      %1352 = vmatpush1.bf16.msra.mxu0 0
      %1353 = vmatprep.subr.bf16.mxu0 0
      %1354 = vmatpush1.bf16.msra.mxu0 0
      %1355 = vmatprep.subr.bf16.mxu0 0
      %1356 = vmatpush1.bf16.msra.mxu0 0
      %1357 = vmatprep.subr.bf16.mxu0 0
      %1358 = vmatpush1.bf16.msra.mxu0 0
      %1359 = vmatprep.mubr.bf16.mxu0 0
      %1360 = vmatmul.mubr.bf16.gmra.mrb[0].mxu0 %v1175
      %v1361 = vpop.f32.mrb[0].mxu0
      %v1362 = vadd.f32 0.0, %v1361
      %v1363 = vpop.f32.mrb[0].mxu0
      %v1364 = vpop.f32.mrb[0].mxu0
      %v1365 = vpop.f32.mrb[0].mxu0
      %1366 = vdwg.mxu0
      %s1367 = scalar_lea.vmem %s7, 128
      %v1368 = vld [vmem:[%s1367] sm:$0xf]
      %v1369 = vld [vmem:[%s1367 + $0x4] sm:$0xf]
      %v1370 = vld [vmem:[%s1367 + $0x8] sm:$0xf]
      %v1371 = vld [vmem:[%s1367 + $0xc] sm:$0xf]
      %v1372 = vld [vmem:[%s1367 + $0x10] sm:$0xf]
      %v1373 = vld [vmem:[%s1367 + $0x14] sm:$0xf]
      %v1374 = vld [vmem:[%s1367 + $0x18] sm:$0xf]
      %v1375 = vld [vmem:[%s1367 + $0x1c] sm:$0xf]
      %v1384 = vunpack.c.l.b16 %v1368
      %v1385 = vunpack.c.l.b16 %v1369
      %v1386 = vunpack.c.l.b16 %v1370
      %v1387 = vunpack.c.l.b16 %v1371
      %v1388 = vunpack.c.l.b16 %v1372
      %v1389 = vunpack.c.l.b16 %v1373
      %v1390 = vunpack.c.l.b16 %v1374
      %v1391 = vunpack.c.l.b16 %v1375
      %v1392 = vpack.c.b16 %v1385, %v1384
      %v1393 = vpack.c.b16 %v1387, %v1386
      %v1394 = vpack.c.b16 %v1389, %v1388
      %v1395 = vpack.c.b16 %v1391, %v1390
      %1400 = vmatprep.subr.bf16.mxu0 0
      %1401 = vmatpush1.bf16.msra.mxu0 %v1392
      %1402 = vmatprep.subr.bf16.mxu0 0
      %1403 = vmatpush1.bf16.msra.mxu0 %v1393
      %1404 = vmatprep.subr.bf16.mxu0 0
      %1405 = vmatpush1.bf16.msra.mxu0 %v1394
      %1406 = vmatprep.subr.bf16.mxu0 0
      %1407 = vmatpush1.bf16.msra.mxu0 %v1395
      %1408 = vmatprep.subr.bf16.mxu0 0
      %1409 = vmatpush1.bf16.msra.mxu0 0
      %1410 = vmatprep.subr.bf16.mxu0 0
      %1411 = vmatpush1.bf16.msra.mxu0 0
      %1412 = vmatprep.subr.bf16.mxu0 0
      %1413 = vmatpush1.bf16.msra.mxu0 0
      %1414 = vmatprep.subr.bf16.mxu0 0
      %1415 = vmatpush1.bf16.msra.mxu0 0
      %1416 = vmatprep.subr.bf16.mxu0 0
      %1417 = vmatpush1.bf16.msra.mxu0 0
      %1418 = vmatprep.subr.bf16.mxu0 0
      %1419 = vmatpush1.bf16.msra.mxu0 0
      %1420 = vmatprep.subr.bf16.mxu0 0
      %1421 = vmatpush1.bf16.msra.mxu0 0
      %1422 = vmatprep.subr.bf16.mxu0 0
      %1423 = vmatpush1.bf16.msra.mxu0 0
      %1424 = vmatprep.subr.bf16.mxu0 0
      %1425 = vmatpush1.bf16.msra.mxu0 0
      %1426 = vmatprep.subr.bf16.mxu0 0
      %1427 = vmatpush1.bf16.msra.mxu0 0
      %1428 = vmatprep.subr.bf16.mxu0 0
      %1429 = vmatpush1.bf16.msra.mxu0 0
      %1430 = vmatprep.subr.bf16.mxu0 0
      %1431 = vmatpush1.bf16.msra.mxu0 0
      %1432 = vmatprep.mubr.bf16.mxu0 0
      %1433 = vmatmul.mubr.bf16.gmra.mrb[0].mxu0 %v1251
      %v1434 = vpop.f32.mrb[0].mxu0
      %v1435 = vadd.f32 0.0, %v1434
      %v1436 = vpop.f32.mrb[0].mxu0
      %v1437 = vpop.f32.mrb[0].mxu0
      %v1438 = vpop.f32.mrb[0].mxu0
      %1439 = vdwg.mxu0
      %v1440 = vlaneseq
      %v1441 = vshrl.u32 %v1440, 7
      %v1442 = vadd.s32 %v1441, 8
      %vm1443 = vcmp.ge.s32.totalorder %v1441, 12
      %vm1444 = vcmp.ge.s32.totalorder %v1442, 12
      %v1445 = vsel %vm1443, -1e+30, 0.0
      %v1446 = vsel %vm1444, -1e+30, 0.0
      %v1448 = vsel %vm751, %v1293, 0
      %1450 = vmatprep.subr.bf16.mxu0 %v1133
      %1451 = vmatpush1.bf16.msra.mxu0 %v1132
      %1452 = vmatprep.subr.bf16.mxu0 %v1135
      %1453 = vmatpush1.bf16.msra.mxu0 %v1134
      %1454 = vmatprep.subr.bf16.mxu0 %v1137
      %1455 = vmatpush1.bf16.msra.mxu0 %v1136
      %1456 = vmatprep.subr.bf16.mxu0 %v1139
      %1457 = vmatpush1.bf16.msra.mxu0 %v1138
      %1458 = vmatprep.subr.bf16.mxu0 0
      %1459 = vmatpush1.bf16.msra.mxu0 0
      %1460 = vmatprep.subr.bf16.mxu0 0
      %1461 = vmatpush1.bf16.msra.mxu0 0
      %1462 = vmatprep.subr.bf16.mxu0 0
      %1463 = vmatpush1.bf16.msra.mxu0 0
      %1464 = vmatprep.subr.bf16.mxu0 0
      %1465 = vmatpush1.bf16.msra.mxu0 0
      %1466 = vmatprep.subr.bf16.mxu0 0
      %1467 = vmatpush1.bf16.msra.mxu0 0
      %1468 = vmatprep.subr.bf16.mxu0 0
      %1469 = vmatpush1.bf16.msra.mxu0 0
      %1470 = vmatprep.subr.bf16.mxu0 0
      %1471 = vmatpush1.bf16.msra.mxu0 0
      %1472 = vmatprep.subr.bf16.mxu0 0
      %1473 = vmatpush1.bf16.msra.mxu0 0
      %1474 = vmatprep.subr.bf16.mxu0 0
      %1475 = vmatpush1.bf16.msra.mxu0 0
      %1476 = vmatprep.subr.bf16.mxu0 0
      %1477 = vmatpush1.bf16.msra.mxu0 0
      %1478 = vmatprep.subr.bf16.mxu0 0
      %1479 = vmatpush1.bf16.msra.mxu0 0
      %1480 = vmatprep.subr.bf16.mxu0 0
      %1481 = vmatpush1.bf16.msra.mxu0 0
      %1482 = vmatprep.mubr.bf16.mxu0 0
      %1483 = vmatmul.mubr.bf16.gmra.mrb[0].mxu0 %v1448
      %v1484 = vpop.f32.mrb[0].mxu0
      %v1485 = vadd.f32 %v1445, %v1484
      %v1486 = vpop.f32.mrb[0].mxu0
      %v1487 = vadd.f32 %v1445, %v1486
      %v1488 = vpop.f32.mrb[0].mxu0
      %v1489 = vadd.f32 %v1446, %v1488
      %v1490 = vpop.f32.mrb[0].mxu0
      %v1491 = vadd.f32 %v1446, %v1490
      %1492 = vdwg.mxu0
      %v1493 = vrot.slane %v1485, 4
      %v1494 = vmax.f32 %v1485, %v1493
      %v1495 = vrot.slane %v1494, 2
      %v1496 = vmax.f32 %v1494, %v1495
      %v1497 = vrot.slane %v1496, 1
      %v1498 = vmax.f32 %v1496, %v1497
      %v1499 = vrot.slane %v1487, 4
      %v1500 = vmax.f32 %v1487, %v1499
      %v1501 = vrot.slane %v1500, 2
      %v1502 = vmax.f32 %v1500, %v1501
      %v1503 = vrot.slane %v1502, 1
      %v1504 = vmax.f32 %v1502, %v1503
      %v1505 = vsub.f32 %v1485, %v1498
      %v1506 = vsub.f32 %v1487, %v1504
      %v1507 = vmul.f32 %v1505, 1.442695
      %v1508 = vpow.pop %v1507
      %v1509 = vmul.f32 %v1506, 1.442695
      %v1510 = vpow.pop %v1509
      %v1511 = vrot.slane %v1508, 4
      %v1512 = vadd.f32 %v1508, %v1511
      %v1513 = vrot.slane %v1512, 2
      %v1514 = vadd.f32 %v1512, %v1513
      %v1515 = vrot.slane %v1514, 1
      %v1516 = vadd.f32 %v1514, %v1515
      %v1517 = vrot.slane %v1510, 4
      %v1518 = vadd.f32 %v1510, %v1517
      %v1519 = vrot.slane %v1518, 2
      %v1520 = vadd.f32 %v1518, %v1519
      %v1521 = vrot.slane %v1520, 1
      %v1522 = vadd.f32 %v1520, %v1521
      %v1523 = vrcp.pop %v1516
      %v1524 = vrcp.pop %v1522
      %v1525 = vmul.f32 %v1508, %v1523
      %v1526 = vmul.f32 %v1510, %v1524
      %v1527 = vrot.slane %v1489, 4
      %v1528 = vmax.f32 %v1489, %v1527
      %v1529 = vrot.slane %v1528, 2
      %v1530 = vmax.f32 %v1528, %v1529
      %v1531 = vrot.slane %v1530, 1
      %v1532 = vmax.f32 %v1530, %v1531
      %v1533 = vrot.slane %v1491, 4
      %v1534 = vmax.f32 %v1491, %v1533
      %v1535 = vrot.slane %v1534, 2
      %v1536 = vmax.f32 %v1534, %v1535
      %v1537 = vrot.slane %v1536, 1
      %v1538 = vmax.f32 %v1536, %v1537
      %v1539 = vsub.f32 %v1489, %v1532
      %v1540 = vsub.f32 %v1491, %v1538
      %v1541 = vmul.f32 %v1539, 1.442695
      %v1542 = vpow.pop %v1541
      %v1543 = vmul.f32 %v1540, 1.442695
      %v1544 = vpow.pop %v1543
      %v1545 = vrot.slane %v1542, 4
      %v1546 = vadd.f32 %v1542, %v1545
      %v1547 = vrot.slane %v1546, 2
      %v1548 = vadd.f32 %v1546, %v1547
      %v1549 = vrot.slane %v1548, 1
      %v1550 = vadd.f32 %v1548, %v1549
      %v1551 = vrot.slane %v1544, 4
      %v1552 = vadd.f32 %v1544, %v1551
      %v1553 = vrot.slane %v1552, 2
      %v1554 = vadd.f32 %v1552, %v1553
      %v1555 = vrot.slane %v1554, 1
      %v1556 = vadd.f32 %v1554, %v1555
      %v1557 = vrcp.pop %v1550
      %v1558 = vrcp.pop %v1556
      %v1559 = vmul.f32 %v1542, %v1557
      %v1560 = vmul.f32 %v1544, %v1558
      %1561 = vxpose.xlu0.b32.start [1/16] %v1362, 128
      %1562 = vxpose.xlu0.b32.cont [2/16] %v1435, 128
      %1563 = vxpose.xlu0.b32.cont [3/16] 0.0, 128
      %1564 = vxpose.xlu0.b32.cont [4/16] 0.0, 128
      %1565 = vxpose.xlu0.b32.cont [5/16] 0.0, 128
      %1566 = vxpose.xlu0.b32.cont [6/16] 0.0, 128
      %1567 = vxpose.xlu0.b32.cont [7/16] 0.0, 128
      %1568 = vxpose.xlu0.b32.cont [8/16] 0.0, 128
      %1569 = vxpose.xlu0.b32.cont [9/16] 0.0, 128
      %1570 = vxpose.xlu0.b32.cont [10/16] 0.0, 128
      %1571 = vxpose.xlu0.b32.cont [11/16] 0.0, 128
      %1572 = vxpose.xlu0.b32.cont [12/16] 0.0, 128
      %1573 = vxpose.xlu0.b32.cont [13/16] 0.0, 128
      %1574 = vxpose.xlu0.b32.cont [14/16] 0.0, 128
      %1575 = vxpose.xlu0.b32.cont [15/16] 0.0, 128
      %1576 = vxpose.xlu0.b32.end [16/16] 0.0, 128
      %v1577 = vpop.trf.xlu0
      %v1578 = vpop.trf.xlu0
      %v1579 = vpop.trf.xlu0
      %v1580 = vpop.trf.xlu0
      %v1581 = vpop.trf.xlu0
      %v1582 = vpop.trf.xlu0
      %v1583 = vpop.trf.xlu0
      %v1584 = vpop.trf.xlu0
      %v1585 = vpop.trf.xlu0
      %v1586 = vpop.trf.xlu0
      %v1587 = vpop.trf.xlu0
      %v1588 = vpop.trf.xlu0
      %v1589 = vpop.trf.xlu0
      %v1590 = vpop.trf.xlu0
      %v1591 = vpop.trf.xlu0
      %v1592 = vpop.trf.xlu0
      %vm1593 = vcmask 130048
      %v1595 = vsel %vm1593, %v1577, 0
      %v1598 = vsel %vm1593, %v1578, 0
      %v1601 = vsel %vm1593, %v1579, 0
      %v1604 = vsel %vm1593, %v1580, 0
      %v1607 = vsel %vm1593, %v1581, 0
      %v1610 = vsel %vm1593, %v1582, 0
      %v1613 = vsel %vm1593, %v1583, 0
      %v1616 = vsel %vm1593, %v1584, 0
      %1618 = vmatprep.subr.mxu0 %v1526
      %1619 = vmatpush1.msra.mxu0 %v1525
      %1620 = vmatprep.subr.mxu0 %v1560
      %1621 = vmatpush1.msra.mxu0 %v1559
      %1622 = vmatprep.subr.mxu0 0.0
      %1623 = vmatpush1.msra.mxu0 0.0
      %1624 = vmatprep.subr.mxu0 0.0
      %1625 = vmatpush1.msra.mxu0 0.0
      %1626 = vmatprep.subr.mxu0 0.0
      %1627 = vmatpush1.msra.mxu0 0.0
      %1628 = vmatprep.subr.mxu0 0.0
      %1629 = vmatpush1.msra.mxu0 0.0
      %1630 = vmatprep.subr.mxu0 0.0
      %1631 = vmatpush1.msra.mxu0 0.0
      %1632 = vmatprep.subr.mxu0 0.0
      %1633 = vmatpush1.msra.mxu0 0.0
      %1634 = vmatprep.subr.mxu0 0.0
      %1635 = vmatpush1.msra.mxu0 0.0
      %1636 = vmatprep.subr.mxu0 0.0
      %1637 = vmatpush1.msra.mxu0 0.0
      %1638 = vmatprep.subr.mxu0 0.0
      %1639 = vmatpush1.msra.mxu0 0.0
      %1640 = vmatprep.subr.mxu0 0.0
      %1641 = vmatpush1.msra.mxu0 0.0
      %1642 = vmatprep.subr.mxu0 0.0
      %1643 = vmatpush1.msra.mxu0 0.0
      %1644 = vmatprep.subr.mxu0 0.0
      %1645 = vmatpush1.msra.mxu0 0.0
      %1646 = vmatprep.subr.mxu0 0.0
      %1647 = vmatpush1.msra.mxu0 0.0
      %1648 = vmatprep.subr.mxu0 0.0
      %1649 = vmatpush1.msra.mxu0 0.0
      %1650 = vmatprep.subr.mxu0 0.0
      %1651 = vmatpush1.msra.mxu0 0.0
      %1652 = vmatprep.subr.mxu0 0.0
      %1653 = vmatpush1.msra.mxu0 0.0
      %1654 = vmatprep.subr.mxu0 0.0
      %1655 = vmatpush1.msra.mxu0 0.0
      %1656 = vmatprep.subr.mxu0 0.0
      %1657 = vmatpush1.msra.mxu0 0.0
      %1658 = vmatprep.subr.mxu0 0.0
      %1659 = vmatpush1.msra.mxu0 0.0
      %1660 = vmatprep.subr.mxu0 0.0
      %1661 = vmatpush1.msra.mxu0 0.0
      %1662 = vmatprep.subr.mxu0 0.0
      %1663 = vmatpush1.msra.mxu0 0.0
      %1664 = vmatprep.subr.mxu0 0.0
      %1665 = vmatpush1.msra.mxu0 0.0
      %1666 = vmatprep.subr.mxu0 0.0
      %1667 = vmatpush1.msra.mxu0 0.0
      %1668 = vmatprep.subr.mxu0 0.0
      %1669 = vmatpush1.msra.mxu0 0.0
      %1670 = vmatprep.subr.mxu0 0.0
      %1671 = vmatpush1.msra.mxu0 0.0
      %1672 = vmatprep.subr.mxu0 0.0
      %1673 = vmatpush1.msra.mxu0 0.0
      %1674 = vmatprep.subr.mxu0 0.0
      %1675 = vmatpush1.msra.mxu0 0.0
      %1676 = vmatprep.subr.mxu0 0.0
      %1677 = vmatpush1.msra.mxu0 0.0
      %1678 = vmatprep.subr.mxu0 0.0
      %1679 = vmatpush1.msra.mxu0 0.0
      %1680 = vmatprep.subr.mxu0 0.0
      %1681 = vmatpush1.msra.mxu0 0.0
      %1682 = vmatprep.mubr.f32.mxu0 0.0
      %1683 = vmatmul.mubr.f32.gmra.mrb[0].mxu0 %v1595
      %v1684 = vpop.f32.mrb[0].mxu0
      %v1685 = vadd.f32 0.0, %v1684
      %v1686 = vpop.f32.mrb[0].mxu0
      %v1687 = vadd.f32 0.0, %v1686
      %1688 = vmatprep.mubr.f32.mxu0 0.0
      %1689 = vmatmul.mubr.f32.gmra.mrb[0].mxu0 %v1598
      %v1690 = vpop.f32.mrb[0].mxu0
      %v1691 = vadd.f32 0.0, %v1690
      %v1692 = vpop.f32.mrb[0].mxu0
      %v1693 = vadd.f32 0.0, %v1692
      %1694 = vmatprep.mubr.f32.mxu0 0.0
      %1695 = vmatmul.mubr.f32.gmra.mrb[0].mxu0 %v1601
      %v1696 = vpop.f32.mrb[0].mxu0
      %v1697 = vadd.f32 0.0, %v1696
      %v1698 = vpop.f32.mrb[0].mxu0
      %v1699 = vadd.f32 0.0, %v1698
      %1700 = vmatprep.mubr.f32.mxu0 0.0
      %1701 = vmatmul.mubr.f32.gmra.mrb[0].mxu0 %v1604
      %v1702 = vpop.f32.mrb[0].mxu0
      %v1703 = vadd.f32 0.0, %v1702
      %v1704 = vpop.f32.mrb[0].mxu0
      %v1705 = vadd.f32 0.0, %v1704
      %1706 = vmatprep.mubr.f32.mxu0 0.0
      %1707 = vmatmul.mubr.f32.gmra.mrb[0].mxu0 %v1607
      %v1708 = vpop.f32.mrb[0].mxu0
      %v1709 = vadd.f32 0.0, %v1708
      %v1710 = vpop.f32.mrb[0].mxu0
      %v1711 = vadd.f32 0.0, %v1710
      %1712 = vmatprep.mubr.f32.mxu0 0.0
      %1713 = vmatmul.mubr.f32.gmra.mrb[0].mxu0 %v1610
      %v1714 = vpop.f32.mrb[0].mxu0
      %v1715 = vadd.f32 0.0, %v1714
      %v1716 = vpop.f32.mrb[0].mxu0
      %v1717 = vadd.f32 0.0, %v1716
      %1718 = vmatprep.mubr.f32.mxu0 0.0
      %1719 = vmatmul.mubr.f32.gmra.mrb[0].mxu0 %v1613
      %v1720 = vpop.f32.mrb[0].mxu0
      %v1721 = vadd.f32 0.0, %v1720
      %v1722 = vpop.f32.mrb[0].mxu0
      %v1723 = vadd.f32 0.0, %v1722
      %1724 = vmatprep.mubr.f32.mxu0 0.0
      %1725 = vmatmul.mubr.f32.gmra.mrb[0].mxu0 %v1616
      %v1726 = vpop.f32.mrb[0].mxu0
      %v1727 = vadd.f32 0.0, %v1726
      %v1728 = vpop.f32.mrb[0].mxu0
      %v1729 = vadd.f32 0.0, %v1728
      %1730 = vdwg.mxu0
      %s1731 = scalar_lea.vmem %s7, 160
      %v1732 = vld [vmem:[%s1731] sm:$0xf]
      %v1733 = vld [vmem:[%s1731 + $0x4] sm:$0xf]
      %v1734 = vld [vmem:[%s1731 + $0x8] sm:$0xf]
      %v1735 = vld [vmem:[%s1731 + $0xc] sm:$0xf]
      %v1736 = vld [vmem:[%s1731 + $0x10] sm:$0xf]
      %v1737 = vld [vmem:[%s1731 + $0x14] sm:$0xf]
      %v1738 = vld [vmem:[%s1731 + $0x18] sm:$0xf]
      %v1739 = vld [vmem:[%s1731 + $0x1c] sm:$0xf]
      %v1740 = vpack.c.bf16 %v1691, %v1685
      %v1741 = vpack.c.bf16 %v1693, %v1687
      %v1742 = vpack.c.bf16 %v1703, %v1697
      %v1743 = vpack.c.bf16 %v1705, %v1699
      %v1744 = vpack.c.bf16 %v1715, %v1709
      %v1745 = vpack.c.bf16 %v1717, %v1711
      %v1746 = vpack.c.bf16 %v1727, %v1721
      %v1747 = vpack.c.bf16 %v1729, %v1723
      %1748 = vset.pattern.permute.xlu0 2
      %1749 = vperm.xlu0 %1748, %v415
      %v1750 = vpop.permute.xlu0 %1749
      %1752 = vset.pattern.permute.xlu0 2
      %1753 = vperm.xlu0 %1752, %v416
      %v1754 = vpop.permute.xlu0 %1753
      %1756 = vset.pattern.permute.xlu0 2
      %1757 = vperm.xlu0 %1756, %v417
      %v1758 = vpop.permute.xlu0 %1757
      %1760 = vset.pattern.permute.xlu0 2
      %1761 = vperm.xlu0 %1760, %v418
      %v1762 = vpop.permute.xlu0 %1761
      %1764 = vset.pattern.permute.xlu0 2
      %1765 = vperm.xlu0 %1764, %v419
      %v1766 = vpop.permute.xlu0 %1765
      %1768 = vset.pattern.permute.xlu0 2
      %1769 = vperm.xlu0 %1768, %v420
      %v1770 = vpop.permute.xlu0 %1769
      %1772 = vset.pattern.permute.xlu0 2
      %1773 = vperm.xlu0 %1772, %v421
      %v1774 = vpop.permute.xlu0 %1773
      %1776 = vset.pattern.permute.xlu0 2
      %1777 = vperm.xlu0 %1776, %v422
      %v1778 = vpop.permute.xlu0 %1777
      %v1788 = vunpack.c.l.b16 %v1732
      %v1789 = vunpack.c.l.b16 %v1733
      %v1790 = vunpack.c.l.b16 %v1734
      %v1791 = vunpack.c.l.b16 %v1735
      %v1792 = vunpack.c.l.b16 %v1736
      %v1793 = vunpack.c.l.b16 %v1737
      %v1794 = vunpack.c.l.b16 %v1738
      %v1795 = vunpack.c.l.b16 %v1739
      %v1796 = vpack.c.b16 %v1789, %v1788
      %v1797 = vpack.c.b16 %v1791, %v1790
      %v1798 = vpack.c.b16 %v1793, %v1792
      %v1799 = vpack.c.b16 %v1795, %v1794
      %v1801 = vsel %vm751, %v1796, 0
      %v1804 = vsel %vm751, %v1797, 0
      %v1807 = vsel %vm751, %v1798, 0
      %v1810 = vsel %vm751, %v1799, 0
      %1812 = vmatprep.subr.bf16.mxu0 %v1741
      %1813 = vmatpush1.bf16.msra.mxu0 %v1740
      %1814 = vmatprep.subr.bf16.mxu0 %v1743
      %1815 = vmatpush1.bf16.msra.mxu0 %v1742
      %1816 = vmatprep.subr.bf16.mxu0 %v1745
      %1817 = vmatpush1.bf16.msra.mxu0 %v1744
      %1818 = vmatprep.subr.bf16.mxu0 %v1747
      %1819 = vmatpush1.bf16.msra.mxu0 %v1746
      %1820 = vmatprep.subr.bf16.mxu0 0
      %1821 = vmatpush1.bf16.msra.mxu0 0
      %1822 = vmatprep.subr.bf16.mxu0 0
      %1823 = vmatpush1.bf16.msra.mxu0 0
      %1824 = vmatprep.subr.bf16.mxu0 0
      %1825 = vmatpush1.bf16.msra.mxu0 0
      %1826 = vmatprep.subr.bf16.mxu0 0
      %1827 = vmatpush1.bf16.msra.mxu0 0
      %1828 = vmatprep.subr.bf16.mxu0 0
      %1829 = vmatpush1.bf16.msra.mxu0 0
      %1830 = vmatprep.subr.bf16.mxu0 0
      %1831 = vmatpush1.bf16.msra.mxu0 0
      %1832 = vmatprep.subr.bf16.mxu0 0
      %1833 = vmatpush1.bf16.msra.mxu0 0
      %1834 = vmatprep.subr.bf16.mxu0 0
      %1835 = vmatpush1.bf16.msra.mxu0 0
      %1836 = vmatprep.subr.bf16.mxu0 0
      %1837 = vmatpush1.bf16.msra.mxu0 0
      %1838 = vmatprep.subr.bf16.mxu0 0
      %1839 = vmatpush1.bf16.msra.mxu0 0
      %1840 = vmatprep.subr.bf16.mxu0 0
      %1841 = vmatpush1.bf16.msra.mxu0 0
      %1842 = vmatprep.subr.bf16.mxu0 0
      %1843 = vmatpush1.bf16.msra.mxu0 0
      %1844 = vmatprep.mubr.bf16.mxu0 0
      %1845 = vmatmul.mubr.bf16.gmra.mrb[0].mxu0 %v1801
      %v1846 = vpop.f32.mrb[0].mxu0
      %v1847 = vadd.f32 %v1750, %v1846
      %v1848 = vpop.f32.mrb[0].mxu0
      %v1849 = vadd.f32 %v1750, %v1848
      %v1850 = vpop.f32.mrb[0].mxu0
      %v1851 = vadd.f32 %v1754, %v1850
      %v1852 = vpop.f32.mrb[0].mxu0
      %v1853 = vadd.f32 %v1754, %v1852
      %1854 = vmatprep.mubr.bf16.mxu0 0
      %1855 = vmatmul.mubr.bf16.gmra.mrb[0].mxu0 %v1804
      %v1856 = vpop.f32.mrb[0].mxu0
      %v1857 = vadd.f32 %v1758, %v1856
      %v1858 = vpop.f32.mrb[0].mxu0
      %v1859 = vadd.f32 %v1758, %v1858
      %v1860 = vpop.f32.mrb[0].mxu0
      %v1861 = vadd.f32 %v1762, %v1860
      %v1862 = vpop.f32.mrb[0].mxu0
      %v1863 = vadd.f32 %v1762, %v1862
      %1864 = vmatprep.mubr.bf16.mxu0 0
      %1865 = vmatmul.mubr.bf16.gmra.mrb[0].mxu0 %v1807
      %v1866 = vpop.f32.mrb[0].mxu0
      %v1867 = vadd.f32 %v1766, %v1866
      %v1868 = vpop.f32.mrb[0].mxu0
      %v1869 = vadd.f32 %v1766, %v1868
      %v1870 = vpop.f32.mrb[0].mxu0
      %v1871 = vadd.f32 %v1770, %v1870
      %v1872 = vpop.f32.mrb[0].mxu0
      %v1873 = vadd.f32 %v1770, %v1872
      %1874 = vmatprep.mubr.bf16.mxu0 0
      %1875 = vmatmul.mubr.bf16.gmra.mrb[0].mxu0 %v1810
      %v1876 = vpop.f32.mrb[0].mxu0
      %v1877 = vadd.f32 %v1774, %v1876
      %v1878 = vpop.f32.mrb[0].mxu0
      %v1879 = vadd.f32 %v1774, %v1878
      %v1880 = vpop.f32.mrb[0].mxu0
      %v1881 = vadd.f32 %v1778, %v1880
      %v1882 = vpop.f32.mrb[0].mxu0
      %v1883 = vadd.f32 %v1778, %v1882
      %1884 = vdwg.mxu0
      %v1885 = vpack.c.bf16 %v1851, %v1847
      %v1886 = vpack.c.bf16 %v1853, %v1849
      %v1887 = vpack.c.bf16 %v1861, %v1857
      %v1888 = vpack.c.bf16 %v1863, %v1859
      %v1889 = vpack.c.bf16 %v1871, %v1867
      %v1890 = vpack.c.bf16 %v1873, %v1869
      %v1891 = vpack.c.bf16 %v1881, %v1877
      %v1892 = vpack.c.bf16 %v1883, %v1879
      %1893 = vmatprep.subr.bf16.mxu0 %v1886
      %1894 = vmatpush1.bf16.msra.mxu0 %v1885
      %1895 = vmatprep.subr.bf16.mxu0 %v1888
      %1896 = vmatpush1.bf16.msra.mxu0 %v1887
      %1897 = vmatprep.subr.bf16.mxu0 %v1890
      %1898 = vmatpush1.bf16.msra.mxu0 %v1889
      %1899 = vmatprep.subr.bf16.mxu0 %v1892
      %1900 = vmatpush1.bf16.msra.mxu0 %v1891
      %1901 = vmatprep.subr.bf16.mxu0 0
      %1902 = vmatpush1.bf16.msra.mxu0 0
      %1903 = vmatprep.subr.bf16.mxu0 0
      %1904 = vmatpush1.bf16.msra.mxu0 0
      %1905 = vmatprep.subr.bf16.mxu0 0
      %1906 = vmatpush1.bf16.msra.mxu0 0
      %1907 = vmatprep.subr.bf16.mxu0 0
      %1908 = vmatpush1.bf16.msra.mxu0 0
      %1909 = vmatprep.subr.bf16.mxu0 0
      %1910 = vmatpush1.bf16.msra.mxu0 0
      %1911 = vmatprep.subr.bf16.mxu0 0
      %1912 = vmatpush1.bf16.msra.mxu0 0
      %1913 = vmatprep.subr.bf16.mxu0 0
      %1914 = vmatpush1.bf16.msra.mxu0 0
      %1915 = vmatprep.subr.bf16.mxu0 0
      %1916 = vmatpush1.bf16.msra.mxu0 0
      %1917 = vmatprep.subr.bf16.mxu0 0
      %1918 = vmatpush1.bf16.msra.mxu0 0
      %1919 = vmatprep.subr.bf16.mxu0 0
      %1920 = vmatpush1.bf16.msra.mxu0 0
      %1921 = vmatprep.subr.bf16.mxu0 0
      %1922 = vmatpush1.bf16.msra.mxu0 0
      %1923 = vmatprep.subr.bf16.mxu0 0
      %1924 = vmatpush1.bf16.msra.mxu0 0
      %1925 = vmatprep.mubr.bf16.mxu0 0
      %1926 = vmatmul.mubr.bf16.gmra.mrb[0].mxu0 %v753
      %v1927 = vpop.f32.mrb[0].mxu0
      %v1928 = vadd.f32 0.0, %v1927
      %v1929 = vpop.f32.mrb[0].mxu0
      %v1930 = vadd.f32 0.0, %v1929
      %v1931 = vpop.f32.mrb[0].mxu0
      %v1932 = vpop.f32.mrb[0].mxu0
      %1933 = vdwg.mxu0
      %v1934 = vadd.f32 %v790, %v1928
      %v1935 = vadd.f32 %v792, %v1930
      %1936 = vst [vmem:[%s413] sm:$0xff] %v1934
      %1937 = vst [vmem:[%s413 + $0x8] sm:$0xff] %v1935
      %p1938 = scmp.lt.s32.totalorder %s21, 1
      %s1939 = scalar_select %p1938, %s21, 1
      %s1940 = smul.addr %s1939, 2
      %s1941 = smul.addr %s1940, 8
      %s1942 = scalar_lea.vmem %s10, %s1941
      // Predicated region
      $region61: #{ip_adapter_forward.1} parent=59 // pred_check
        %p1943 = pneg %p269
      $region62: #{ip_adapter_forward.1} parent=59 // pred_check_branch
        %1945 = sbr.rel (%p1943) target = $region64
      $region63: #{ip_adapter_forward.1} parent=59 // pred_region
        _
      $region64: #{ip_adapter_forward.1} parent=59 // pred_fallthru
        _
    $region60: #{ip_adapter_forward.1} parent=5 // pred_fallthru
      _
    %p1946 = scmp.le.s32.totalorder 2, %s16
    // Predicated region
    $region65: #{ip_adapter_forward.1} parent=5 // pred_check
      %p1947 = pneg %p1946
    $region66: #{ip_adapter_forward.1} parent=5 // pred_check_branch
      %1949 = sbr.rel (%p1947) target = $region68
    $region67: #{ip_adapter_forward.1} parent=5 // pred_region
      %s1950 = ssub.s32 %s16, 2
      // Predicated region
      $region69: #{ip_adapter_forward.1} parent=67 // pred_check
        %p1951 = pneg %p275
      $region70: #{ip_adapter_forward.1} parent=67 // pred_check_branch
        %1953 = sbr.rel (%p1951) target = $region72
      $region71: #{ip_adapter_forward.1} parent=67 // pred_region
        %p1954 = scmp.lt.s32.totalorder %s22, 1
        %s1955 = scalar_select %p1954, %s22, 1
        %s1956 = smul.addr %s1955, 2
        %s1957 = smul.addr %s1956, 8
        %s1958 = scalar_lea.vmem %s10, %s1957
      $region72: #{ip_adapter_forward.1} parent=67 // pred_fallthru
        _
    $region68: #{ip_adapter_forward.1} parent=5 // pred_fallthru
      _
  $region6: #{ip_adapter_forward.1} parent=0 // loop_footer
    %s20 = sadd.s32 1, %s16
  $region7: #{ip_adapter_forward.1} parent=0 // loop_footer_branch
    %15 = sbr.rel target = $region3
  $region8: #{ip_adapter_forward.1} parent=0 // loop_exit
    _

</llo_original>
